<compile_context>
chip_gen: v6e
topology: v6e:2x2x1
jax: 0.10.0
libtpu: 0.0.40
codegen_flags: <defaults>
</compile_context>

<pallas_src>
import math

import jax
import jax.numpy as jnp
from jax import lax
from jax.experimental import pallas as pl
from jax.experimental.pallas import tpu as pltpu


def _round_up(x, m):
    return ((x + m - 1) // m) * m


# ----------------------------------------------------------------------------
# Pallas kernels
# ----------------------------------------------------------------------------

def _input_layer_kernel(z_ref, w_ref, b_ref, o_ref):
    """EqualConvTranspose2d(Cin->Cout, k=4, s=1, p=0) on a 1x1 input,
    fused with PixelNorm and LeakyReLU(0.2).

    z_ref: (N, Cin)
    w_ref: (Cin, 16*Cout)   fused per-position weight (p = 4*kh + kw)
    b_ref: (1, Cout)
    o_ref: (N, 16, Cout)
    """
    cout = o_ref.shape[-1]
    # One MXU matmul for all 16 output spatial positions.
    y = jnp.dot(z_ref[...], w_ref[...], preferred_element_type=jnp.float32)
    b = b_ref[...]
    for p in range(16):
        yp = y[:, p * cout:(p + 1) * cout] + b
        # PixelNorm (unconditional here, matching the PyTorch input_layer).
        m = jnp.mean(yp * yp, axis=-1, keepdims=True)
        yp = yp * lax.rsqrt(m + 1e-8)
        # LeakyReLU(0.2)
        o_ref[:, p, :] = jnp.where(yp >= 0.0, yp, 0.2 * yp)


def _make_conv3_kernel(H, W, P, pixel_norm):
    """3x3 conv (pad=1, fused zero-padding in VMEM) + PixelNorm? + LeakyReLU.

    x_ref : (1, H, W, Cin)
    w_ref : (9, Cin, Cout)        tap index t = kh*3 + kw
    b_ref : (1, Cout)
    o_ref : (1, H, W, Cout)
    xp_ref: VMEM scratch ((H+3)*P, Cin), flat zero-padded image, row pitch P
            (P is a multiple of 8 and >= W+2).
    """
    def kernel(x_ref, w_ref, b_ref, o_ref, xp_ref):
        cin = x_ref.shape[-1]
        cout = o_ref.shape[-1]

        # Build the zero-padded image in VMEM (no HBM round-trip for padding).
        xp_ref[...] = jnp.zeros(((H + 3) * P, cin), jnp.float32)

        @pl.loop(0, H)
        def _(h):
            xp_ref[pl.ds((h + 1) * P + 1, W), :] = x_ref[0, h]

        # 9 shifted-slab matmuls; M = H*P keeps the MXU full.
        # acc row o = h*P + w; tap (kh, kw) reads flat row o + kh*P + kw.
        acc = jnp.zeros((H * P, cout), jnp.float32)
        for kh in range(3):
            for kw in range(3):
                xs = xp_ref[pl.ds(kh * P + kw, H * P), :]
                acc = acc + jnp.dot(xs, w_ref[kh * 3 + kw],
                                    preferred_element_type=jnp.float32)

        acc = acc + b_ref[...]
        if pixel_norm:
            m = jnp.mean(acc * acc, axis=-1, keepdims=True)
            acc = acc * lax.rsqrt(m + 1e-8)
        acc = jnp.where(acc >= 0.0, acc, 0.2 * acc)

        # P % 8 == 0 -> this reshape is layout-free; drop the pitch columns.
        o_ref[0] = acc.reshape(H, P, cout)[:, :W, :].astype(o_ref.dtype)

    return kernel


def _rgb_kernel(x_ref, w_ref, b_ref, o_ref):
    """1x1 conv (to_rgb), emitted lane-dense and directly in NCHW layout.

    x_ref: (1, HW, Cin)
    w_ref: (3, Cin)
    b_ref: (3, 1)
    o_ref: (1, 3, HW)
    """
    y = lax.dot_general(w_ref[...], x_ref[0], (((1,), (1,)), ((), ())),
                        preferred_element_type=jnp.float32)   # (3, HW)
    o_ref[0] = y + b_ref[...]


# ----------------------------------------------------------------------------
# Pallas wrappers
# ----------------------------------------------------------------------------

def input_layer_apply(z, w, b):
    """z: (N, Cin) -> (N, 4, 4, Cout) NHWC."""
    N, Cin = z.shape
    Cout = b.shape[0]
    out = pl.pallas_call(
        _input_layer_kernel,
        out_shape=jax.ShapeDtypeStruct((N, 16, Cout), jnp.float32),
        grid=(1,),
        in_specs=[
            pl.BlockSpec((N, Cin), lambda i: (0, 0)),
            pl.BlockSpec((Cin, 16 * Cout), lambda i: (0, 0)),
            pl.BlockSpec((1, Cout), lambda i: (0, 0)),
        ],
        out_specs=pl.BlockSpec((N, 16, Cout), lambda i: (0, 0, 0)),
        compiler_params=pltpu.CompilerParams(
            dimension_semantics=("arbitrary",)),
    )(z, w, b.reshape(1, Cout))
    return out.reshape(N, 4, 4, Cout)


def conv3_apply(x, w, b, pixel_norm):
    """x: (N, H, W, Cin) -> (N, H, W, Cout). 3x3 conv pad=1 + PixelNorm? + LeakyReLU."""
    N, H, W, Cin = x.shape
    Cout = w.shape[-1]
    P = _round_up(W + 2, 8)
    kernel = _make_conv3_kernel(H, W, P, pixel_norm)
    return pl.pallas_call(
        kernel,
        out_shape=jax.ShapeDtypeStruct((N, H, W, Cout), jnp.float32),
        grid=(N,),
        in_specs=[
            pl.BlockSpec((1, H, W, Cin), lambda n: (n, 0, 0, 0)),
            pl.BlockSpec((9, Cin, Cout), lambda n: (0, 0, 0)),
            pl.BlockSpec((1, Cout), lambda n: (0, 0)),
        ],
        out_specs=pl.BlockSpec((1, H, W, Cout), lambda n: (n, 0, 0, 0)),
        scratch_shapes=[pltpu.VMEM(((H + 3) * P, Cin), jnp.float32)],
        compiler_params=pltpu.CompilerParams(
            dimension_semantics=("parallel",),
            vmem_limit_bytes=48 * 1024 * 1024),
    )(x, w, b.reshape(1, Cout))


def to_rgb_apply(x, w, b):
    """x: (N, H, W, Cin) NHWC -> (N, 3, H, W) NCHW. 1x1 conv, lane-dense output."""
    N, H, W, Cin = x.shape
    HW = H * W
    x2 = x.reshape(N, HW, Cin)
    out = pl.pallas_call(
        _rgb_kernel,
        out_shape=jax.ShapeDtypeStruct((N, 3, HW), jnp.float32),
        grid=(N,),
        in_specs=[
            pl.BlockSpec((1, HW, Cin), lambda n: (n, 0, 0)),
            pl.BlockSpec((3, Cin), lambda n: (0, 0)),
            pl.BlockSpec((3, 1), lambda n: (0, 0)),
        ],
        out_specs=pl.BlockSpec((1, 3, HW), lambda n: (n, 0, 0)),
        compiler_params=pltpu.CompilerParams(
            dimension_semantics=("parallel",)),
    )(x2, w, b.reshape(3, 1))
    return out.reshape(N, 3, H, W)


def conv_block_apply(x, bp, pixel_norm):
    x = conv3_apply(x, bp["w1"], bp["b1"], pixel_norm)
    x = conv3_apply(x, bp["w2"], bp["b2"], pixel_norm)
    return x


# ----------------------------------------------------------------------------
# Plain-JAX glue: bilinear x2 upsample (align_corners=False), matching
# F.interpolate(scale_factor=2, mode='bilinear', align_corners=False).
# ----------------------------------------------------------------------------

def _upsample2x_axis(x, axis):
    L = x.shape[axis]
    src = (jnp.arange(2 * L, dtype=jnp.float32) + 0.5) / 2.0 - 0.5
    src = jnp.maximum(src, 0.0)
    i0 = jnp.floor(src).astype(jnp.int32)
    i1 = jnp.minimum(i0 + 1, L - 1)
    w1 = src - i0.astype(jnp.float32)
    w0 = 1.0 - w1
    x0 = jnp.take(x, i0, axis=axis)
    x1 = jnp.take(x, i1, axis=axis)
    shp = [1] * x.ndim
    shp[axis] = 2 * L
    return x0 * w0.reshape(shp) + x1 * w1.reshape(shp)


def upscale2x(x, axes):
    for ax in axes:
        x = _upsample2x_axis(x, ax)
    return x


# ----------------------------------------------------------------------------
# Parameter init (deterministic, equalized-LR scale folded into weights).
# ----------------------------------------------------------------------------

def init_generator_params(key, input_code_dim, in_channel):
    keys = iter(jax.random.split(key, 64))

    def conv_t_init(cin, cout):
        # PyTorch ConvTranspose2d weight is (cin, cout, 4, 4); EqualLR fan_in
        # = size(1) * 16 = cout * 16.  Stored fused as (cin, 16*cout).
        scale = math.sqrt(2.0 / (cout * 16))
        w = jax.random.normal(next(keys), (cin, 16 * cout), jnp.float32) * scale
        return w, jnp.zeros((cout,), jnp.float32)

    def conv3_init(cin, cout):
        scale = math.sqrt(2.0 / (cin * 9))
        w = jax.random.normal(next(keys), (9, cin, cout), jnp.float32) * scale
        return w, jnp.zeros((cout,), jnp.float32)

    def conv1_init(cin):
        scale = math.sqrt(2.0 / cin)
        w = jax.random.normal(next(keys), (3, cin), jnp.float32) * scale
        return w, jnp.zeros((3,), jnp.float32)

    def block(cin, cout):
        w1, b1 = conv3_init(cin, cout)
        w2, b2 = conv3_init(cout, cout)
        return dict(w1=w1, b1=b1, w2=w2, b2=b2)

    C = in_channel
    p = {}
    p["input_w"], p["input_b"] = conv_t_init(input_code_dim, C)
    p["prog4"] = block(C, C)
    p["prog8"] = block(C, C)
    p["prog16"] = block(C, C)
    p["prog32"] = block(C, C)
    p["prog64"] = block(C, C // 2)
    p["prog128"] = block(C // 2, C // 4)
    p["prog256"] = block(C // 4, C // 4)
    for name, cin in [("rgb4", C), ("rgb8", C), ("rgb16", C), ("rgb32", C),
                      ("rgb64", C // 2), ("rgb128", C // 4), ("rgb256", C // 4)]:
        w, b = conv1_init(cin)
        p[name + "_w"], p[name + "_b"] = w, b
    return p


# ----------------------------------------------------------------------------
# Generator forward (rtil == 0 path of the PyTorch module).
# ----------------------------------------------------------------------------

def generator_forward(params, z, step=0, alpha=-1.0, pixel_norm=True):
    """z: (N, input_code_dim) -> NCHW image (N, 3, 4*2**step, 4*2**step)."""
    step = min(int(step), 6)

    out_4 = input_layer_apply(z, params["input_w"], params["input_b"])
    out_4 = conv_block_apply(out_4, params["prog4"], pixel_norm)

    if step == 0:
        return to_rgb_apply(out_4, params["rgb4_w"], params["rgb4_b"])

    progs = ["prog8", "prog16", "prog32", "prog64", "prog128", "prog256"]
    rgbs = ["rgb4", "rgb8", "rgb16", "rgb32", "rgb64", "rgb128", "rgb256"]

    prev = out_4
    feat_prev = out_4
    for s in range(1, step + 1):
        cur = conv_block_apply(upscale2x(prev, axes=(1, 2)),
                               params[progs[s - 1]], pixel_norm)
        feat_prev, prev = prev, cur

    if 0.0 <= alpha < 1.0:
        skip = upscale2x(
            to_rgb_apply(feat_prev, params[rgbs[step - 1] + "_w"],
                         params[rgbs[step - 1] + "_b"]),
            axes=(2, 3))
        rgb = (1.0 - alpha) * skip + alpha * to_rgb_apply(
            prev, params[rgbs[step] + "_w"], params[rgbs[step] + "_b"])
    else:
        rgb = to_rgb_apply(prev, params[rgbs[step] + "_w"],
                           params[rgbs[step] + "_b"])
    return rgb


# ----------------------------------------------------------------------------
# Demo
# ----------------------------------------------------------------------------

if __name__ == "__main__":
    key = jax.random.PRNGKey(0)
    k_param, k_z = jax.random.split(key)

    batch = 2
    input_code_dim = 8
    in_channel = 16
    step = 2          # 4 -> 8 -> 16 resolution
    alpha = 0.5       # blend skip-rgb with current-rgb
    pixel_norm = True

    params = init_generator_params(k_param, input_code_dim, in_channel)
    z = jax.random.normal(k_z, (batch, input_code_dim), jnp.float32)

    out = generator_forward(params, z, step=step, alpha=alpha,
                            pixel_norm=pixel_norm)
    out = jax.block_until_ready(out)

    expected = (batch, 3, 4 * 2 ** step, 4 * 2 ** step)
    assert out.shape == expected, (out.shape, expected)
    assert out.dtype == jnp.float32
    assert bool(jnp.all(jnp.isfinite(out)))
    print("KERNEL_OK")
</pallas_src>

<mosaic_0001>
module attributes {stable_mosaic.version = 11 : i64} {
  func.func @_input_layer_kernel(%arg0: i32, %arg1: memref<2x8xf32, #tpu.memory_space<vmem>>, %arg2: memref<8x256xf32, #tpu.memory_space<vmem>>, %arg3: memref<1x16xf32, #tpu.memory_space<vmem>>, %arg4: memref<2x16x16xf32, #tpu.memory_space<vmem>>) attributes {dimension_semantics = [#tpu.dimension_semantics<arbitrary>], iteration_bounds = array<i64: 1>, scalar_prefetch = 0 : i64, scratch_operands = 0 : i64, tpu.core_type = #tpu.core_type<tc>, window_params = [{pipeline_mode = #tpu.pipeline_mode<synchronous>, transform_indices = @transform_0, window_bounds = array<i64: 2, 8>}, {pipeline_mode = #tpu.pipeline_mode<synchronous>, transform_indices = @transform_1, window_bounds = array<i64: 8, 256>}, {pipeline_mode = #tpu.pipeline_mode<synchronous>, transform_indices = @transform_2, window_bounds = array<i64: 1, 16>}, {pipeline_mode = #tpu.pipeline_mode<synchronous>, transform_indices = @transform_3, window_bounds = array<i64: 2, 16, 16>}]} {
    %c0 = arith.constant 0 : index
    %c0_0 = arith.constant 0 : index
    %0 = vector.load %arg1[%c0, %c0_0] : memref<2x8xf32, #tpu.memory_space<vmem>>, vector<2x8xf32>
    %c0_1 = arith.constant 0 : index
    %c0_2 = arith.constant 0 : index
    %1 = vector.load %arg2[%c0_1, %c0_2] : memref<8x256xf32, #tpu.memory_space<vmem>>, vector<8x256xf32>
    %cst = arith.constant dense<0.000000e+00> : vector<2x256xf32>
    %2 = tpu.matmul %0, %1, %cst {dimension_numbers = #tpu.dot_dimension_numbers<[1], [0], [0], [1], [0, 0, 1, 1], [], []>} : vector<2x8xf32>, vector<8x256xf32>, vector<2x256xf32> -> vector<2x256xf32>
    %c0_3 = arith.constant 0 : index
    %c0_4 = arith.constant 0 : index
    %3 = vector.load %arg3[%c0_3, %c0_4] : memref<1x16xf32, #tpu.memory_space<vmem>>, vector<1x16xf32>
    %4 = vector.extract_strided_slice %2 {offsets = [0, 0], sizes = [2, 16], strides = [1, 1]} : vector<2x256xf32> to vector<2x16xf32>
    %5 = vector.broadcast %3 : vector<1x16xf32> to vector<2x16xf32>
    %6 = arith.addf %4, %5 : vector<2x16xf32>
    %7 = arith.mulf %6, %6 : vector<2x16xf32>
    %cst_5 = arith.constant dense<0.000000e+00> : vector<2xf32>
    %8 = vector.multi_reduction <add>, %7, %cst_5 [1] : vector<2x16xf32> to vector<2xf32>
    %9 = vector.shape_cast %8 : vector<2xf32> to vector<2x1xf32>
    %cst_6 = arith.constant 1.600000e+01 : f32
    %10 = vector.broadcast %cst_6 : f32 to vector<2x1xf32>
    %11 = arith.divf %9, %10 : vector<2x1xf32>
    %cst_7 = arith.constant 9.99999993E-9 : f32
    %12 = vector.broadcast %cst_7 : f32 to vector<2x1xf32>
    %13 = arith.addf %11, %12 : vector<2x1xf32>
    %14 = math.rsqrt %13 : vector<2x1xf32>
    %15 = vector.broadcast %14 : vector<2x1xf32> to vector<2x16xf32>
    %16 = arith.mulf %6, %15 : vector<2x16xf32>
    %cst_8 = arith.constant 0.000000e+00 : f32
    %17 = vector.broadcast %cst_8 : f32 to vector<2x16xf32>
    %18 = arith.cmpf oge, %16, %17 : vector<2x16xf32>
    %cst_9 = arith.constant 2.000000e-01 : f32
    %19 = vector.broadcast %cst_9 : f32 to vector<2x16xf32>
    %20 = arith.mulf %19, %16 : vector<2x16xf32>
    %21 = arith.select %18, %16, %20 : vector<2x16xi1>, vector<2x16xf32>
    %c0_10 = arith.constant 0 : index
    %c0_11 = arith.constant 0 : index
    %c0_12 = arith.constant 0 : index
    %22 = vector.load %arg4[%c0_10, %c0_11, %c0_12] : memref<2x16x16xf32, #tpu.memory_space<vmem>>, vector<2x1x16xf32>
    %23 = vector.shape_cast %22 : vector<2x1x16xf32> to vector<2x16xf32>
    %24 = vector.shape_cast %21 : vector<2x16xf32> to vector<2x1x16xf32>
    tpu.vector_store %arg4[%c0_10, %c0_11, %c0_12], %24 {strides = array<i32>} : memref<2x16x16xf32, #tpu.memory_space<vmem>>, vector<2x1x16xf32>,
    %25 = vector.extract_strided_slice %2 {offsets = [0, 16], sizes = [2, 16], strides = [1, 1]} : vector<2x256xf32> to vector<2x16xf32>
    %26 = vector.broadcast %3 : vector<1x16xf32> to vector<2x16xf32>
    %27 = arith.addf %25, %26 : vector<2x16xf32>
    %28 = arith.mulf %27, %27 : vector<2x16xf32>
    %cst_13 = arith.constant dense<0.000000e+00> : vector<2xf32>
    %29 = vector.multi_reduction <add>, %28, %cst_13 [1] : vector<2x16xf32> to vector<2xf32>
    %30 = vector.shape_cast %29 : vector<2xf32> to vector<2x1xf32>
    %cst_14 = arith.constant 1.600000e+01 : f32
    %31 = vector.broadcast %cst_14 : f32 to vector<2x1xf32>
    %32 = arith.divf %30, %31 : vector<2x1xf32>
    %cst_15 = arith.constant 9.99999993E-9 : f32
    %33 = vector.broadcast %cst_15 : f32 to vector<2x1xf32>
    %34 = arith.addf %32, %33 : vector<2x1xf32>
    %35 = math.rsqrt %34 : vector<2x1xf32>
    %36 = vector.broadcast %35 : vector<2x1xf32> to vector<2x16xf32>
    %37 = arith.mulf %27, %36 : vector<2x16xf32>
    %cst_16 = arith.constant 0.000000e+00 : f32
    %38 = vector.broadcast %cst_16 : f32 to vector<2x16xf32>
    %39 = arith.cmpf oge, %37, %38 : vector<2x16xf32>
    %cst_17 = arith.constant 2.000000e-01 : f32
    %40 = vector.broadcast %cst_17 : f32 to vector<2x16xf32>
    %41 = arith.mulf %40, %37 : vector<2x16xf32>
    %42 = arith.select %39, %37, %41 : vector<2x16xi1>, vector<2x16xf32>
    %c0_18 = arith.constant 0 : index
    %c1 = arith.constant 1 : index
    %c0_19 = arith.constant 0 : index
    %43 = vector.load %arg4[%c0_18, %c1, %c0_19] : memref<2x16x16xf32, #tpu.memory_space<vmem>>, vector<2x1x16xf32>
    %44 = vector.shape_cast %43 : vector<2x1x16xf32> to vector<2x16xf32>
    %45 = vector.shape_cast %42 : vector<2x16xf32> to vector<2x1x16xf32>
    tpu.vector_store %arg4[%c0_18, %c1, %c0_19], %45 {strides = array<i32>} : memref<2x16x16xf32, #tpu.memory_space<vmem>>, vector<2x1x16xf32>,
    %46 = vector.extract_strided_slice %2 {offsets = [0, 32], sizes = [2, 16], strides = [1, 1]} : vector<2x256xf32> to vector<2x16xf32>
    %47 = vector.broadcast %3 : vector<1x16xf32> to vector<2x16xf32>
    %48 = arith.addf %46, %47 : vector<2x16xf32>
    %49 = arith.mulf %48, %48 : vector<2x16xf32>
    %cst_20 = arith.constant dense<0.000000e+00> : vector<2xf32>
    %50 = vector.multi_reduction <add>, %49, %cst_20 [1] : vector<2x16xf32> to vector<2xf32>
    %51 = vector.shape_cast %50 : vector<2xf32> to vector<2x1xf32>
    %cst_21 = arith.constant 1.600000e+01 : f32
    %52 = vector.broadcast %cst_21 : f32 to vector<2x1xf32>
    %53 = arith.divf %51, %52 : vector<2x1xf32>
    %cst_22 = arith.constant 9.99999993E-9 : f32
    %54 = vector.broadcast %cst_22 : f32 to vector<2x1xf32>
    %55 = arith.addf %53, %54 : vector<2x1xf32>
    %56 = math.rsqrt %55 : vector<2x1xf32>
    %57 = vector.broadcast %56 : vector<2x1xf32> to vector<2x16xf32>
    %58 = arith.mulf %48, %57 : vector<2x16xf32>
    %cst_23 = arith.constant 0.000000e+00 : f32
    %59 = vector.broadcast %cst_23 : f32 to vector<2x16xf32>
    %60 = arith.cmpf oge, %58, %59 : vector<2x16xf32>
    %cst_24 = arith.constant 2.000000e-01 : f32
    %61 = vector.broadcast %cst_24 : f32 to vector<2x16xf32>
    %62 = arith.mulf %61, %58 : vector<2x16xf32>
    %63 = arith.select %60, %58, %62 : vector<2x16xi1>, vector<2x16xf32>
    %c0_25 = arith.constant 0 : index
    %c2 = arith.constant 2 : index
    %c0_26 = arith.constant 0 : index
    %64 = vector.load %arg4[%c0_25, %c2, %c0_26] : memref<2x16x16xf32, #tpu.memory_space<vmem>>, vector<2x1x16xf32>
    %65 = vector.shape_cast %64 : vector<2x1x16xf32> to vector<2x16xf32>
    %66 = vector.shape_cast %63 : vector<2x16xf32> to vector<2x1x16xf32>
    tpu.vector_store %arg4[%c0_25, %c2, %c0_26], %66 {strides = array<i32>} : memref<2x16x16xf32, #tpu.memory_space<vmem>>, vector<2x1x16xf32>,
    %67 = vector.extract_strided_slice %2 {offsets = [0, 48], sizes = [2, 16], strides = [1, 1]} : vector<2x256xf32> to vector<2x16xf32>
    %68 = vector.broadcast %3 : vector<1x16xf32> to vector<2x16xf32>
    %69 = arith.addf %67, %68 : vector<2x16xf32>
    %70 = arith.mulf %69, %69 : vector<2x16xf32>
    %cst_27 = arith.constant dense<0.000000e+00> : vector<2xf32>
    %71 = vector.multi_reduction <add>, %70, %cst_27 [1] : vector<2x16xf32> to vector<2xf32>
    %72 = vector.shape_cast %71 : vector<2xf32> to vector<2x1xf32>
    %cst_28 = arith.constant 1.600000e+01 : f32
    %73 = vector.broadcast %cst_28 : f32 to vector<2x1xf32>
    %74 = arith.divf %72, %73 : vector<2x1xf32>
    %cst_29 = arith.constant 9.99999993E-9 : f32
    %75 = vector.broadcast %cst_29 : f32 to vector<2x1xf32>
    %76 = arith.addf %74, %75 : vector<2x1xf32>
    %77 = math.rsqrt %76 : vector<2x1xf32>
    %78 = vector.broadcast %77 : vector<2x1xf32> to vector<2x16xf32>
    %79 = arith.mulf %69, %78 : vector<2x16xf32>
    %cst_30 = arith.constant 0.000000e+00 : f32
    %80 = vector.broadcast %cst_30 : f32 to vector<2x16xf32>
    %81 = arith.cmpf oge, %79, %80 : vector<2x16xf32>
    %cst_31 = arith.constant 2.000000e-01 : f32
    %82 = vector.broadcast %cst_31 : f32 to vector<2x16xf32>
    %83 = arith.mulf %82, %79 : vector<2x16xf32>
    %84 = arith.select %81, %79, %83 : vector<2x16xi1>, vector<2x16xf32>
    %c0_32 = arith.constant 0 : index
    %c3 = arith.constant 3 : index
    %c0_33 = arith.constant 0 : index
    %85 = vector.load %arg4[%c0_32, %c3, %c0_33] : memref<2x16x16xf32, #tpu.memory_space<vmem>>, vector<2x1x16xf32>
    %86 = vector.shape_cast %85 : vector<2x1x16xf32> to vector<2x16xf32>
    %87 = vector.shape_cast %84 : vector<2x16xf32> to vector<2x1x16xf32>
    tpu.vector_store %arg4[%c0_32, %c3, %c0_33], %87 {strides = array<i32>} : memref<2x16x16xf32, #tpu.memory_space<vmem>>, vector<2x1x16xf32>,
    %88 = vector.extract_strided_slice %2 {offsets = [0, 64], sizes = [2, 16], strides = [1, 1]} : vector<2x256xf32> to vector<2x16xf32>
    %89 = vector.broadcast %3 : vector<1x16xf32> to vector<2x16xf32>
    %90 = arith.addf %88, %89 : vector<2x16xf32>
    %91 = arith.mulf %90, %90 : vector<2x16xf32>
    %cst_34 = arith.constant dense<0.000000e+00> : vector<2xf32>
    %92 = vector.multi_reduction <add>, %91, %cst_34 [1] : vector<2x16xf32> to vector<2xf32>
    %93 = vector.shape_cast %92 : vector<2xf32> to vector<2x1xf32>
    %cst_35 = arith.constant 1.600000e+01 : f32
    %94 = vector.broadcast %cst_35 : f32 to vector<2x1xf32>
    %95 = arith.divf %93, %94 : vector<2x1xf32>
    %cst_36 = arith.constant 9.99999993E-9 : f32
    %96 = vector.broadcast %cst_36 : f32 to vector<2x1xf32>
    %97 = arith.addf %95, %96 : vector<2x1xf32>
    %98 = math.rsqrt %97 : vector<2x1xf32>
    %99 = vector.broadcast %98 : vector<2x1xf32> to vector<2x16xf32>
    %100 = arith.mulf %90, %99 : vector<2x16xf32>
    %cst_37 = arith.constant 0.000000e+00 : f32
    %101 = vector.broadcast %cst_37 : f32 to vector<2x16xf32>
    %102 = arith.cmpf oge, %100, %101 : vector<2x16xf32>
    %cst_38 = arith.constant 2.000000e-01 : f32
    %103 = vector.broadcast %cst_38 : f32 to vector<2x16xf32>
    %104 = arith.mulf %103, %100 : vector<2x16xf32>
    %105 = arith.select %102, %100, %104 : vector<2x16xi1>, vector<2x16xf32>
    %c0_39 = arith.constant 0 : index
    %c4 = arith.constant 4 : index
    %c0_40 = arith.constant 0 : index
    %106 = vector.load %arg4[%c0_39, %c4, %c0_40] : memref<2x16x16xf32, #tpu.memory_space<vmem>>, vector<2x1x16xf32>
    %107 = vector.shape_cast %106 : vector<2x1x16xf32> to vector<2x16xf32>
    %108 = vector.shape_cast %105 : vector<2x16xf32> to vector<2x1x16xf32>
    tpu.vector_store %arg4[%c0_39, %c4, %c0_40], %108 {strides = array<i32>} : memref<2x16x16xf32, #tpu.memory_space<vmem>>, vector<2x1x16xf32>,
    %109 = vector.extract_strided_slice %2 {offsets = [0, 80], sizes = [2, 16], strides = [1, 1]} : vector<2x256xf32> to vector<2x16xf32>
    %110 = vector.broadcast %3 : vector<1x16xf32> to vector<2x16xf32>
    %111 = arith.addf %109, %110 : vector<2x16xf32>
    %112 = arith.mulf %111, %111 : vector<2x16xf32>
    %cst_41 = arith.constant dense<0.000000e+00> : vector<2xf32>
    %113 = vector.multi_reduction <add>, %112, %cst_41 [1] : vector<2x16xf32> to vector<2xf32>
    %114 = vector.shape_cast %113 : vector<2xf32> to vector<2x1xf32>
    %cst_42 = arith.constant 1.600000e+01 : f32
    %115 = vector.broadcast %cst_42 : f32 to vector<2x1xf32>
    %116 = arith.divf %114, %115 : vector<2x1xf32>
    %cst_43 = arith.constant 9.99999993E-9 : f32
    %117 = vector.broadcast %cst_43 : f32 to vector<2x1xf32>
    %118 = arith.addf %116, %117 : vector<2x1xf32>
    %119 = math.rsqrt %118 : vector<2x1xf32>
    %120 = vector.broadcast %119 : vector<2x1xf32> to vector<2x16xf32>
    %121 = arith.mulf %111, %120 : vector<2x16xf32>
    %cst_44 = arith.constant 0.000000e+00 : f32
    %122 = vector.broadcast %cst_44 : f32 to vector<2x16xf32>
    %123 = arith.cmpf oge, %121, %122 : vector<2x16xf32>
    %cst_45 = arith.constant 2.000000e-01 : f32
    %124 = vector.broadcast %cst_45 : f32 to vector<2x16xf32>
    %125 = arith.mulf %124, %121 : vector<2x16xf32>
    %126 = arith.select %123, %121, %125 : vector<2x16xi1>, vector<2x16xf32>
    %c0_46 = arith.constant 0 : index
    %c5 = arith.constant 5 : index
    %c0_47 = arith.constant 0 : index
    %127 = vector.load %arg4[%c0_46, %c5, %c0_47] : memref<2x16x16xf32, #tpu.memory_space<vmem>>, vector<2x1x16xf32>
    %128 = vector.shape_cast %127 : vector<2x1x16xf32> to vector<2x16xf32>
    %129 = vector.shape_cast %126 : vector<2x16xf32> to vector<2x1x16xf32>
    tpu.vector_store %arg4[%c0_46, %c5, %c0_47], %129 {strides = array<i32>} : memref<2x16x16xf32, #tpu.memory_space<vmem>>, vector<2x1x16xf32>,
    %130 = vector.extract_strided_slice %2 {offsets = [0, 96], sizes = [2, 16], strides = [1, 1]} : vector<2x256xf32> to vector<2x16xf32>
    %131 = vector.broadcast %3 : vector<1x16xf32> to vector<2x16xf32>
    %132 = arith.addf %130, %131 : vector<2x16xf32>
    %133 = arith.mulf %132, %132 : vector<2x16xf32>
    %cst_48 = arith.constant dense<0.000000e+00> : vector<2xf32>
    %134 = vector.multi_reduction <add>, %133, %cst_48 [1] : vector<2x16xf32> to vector<2xf32>
    %135 = vector.shape_cast %134 : vector<2xf32> to vector<2x1xf32>
    %cst_49 = arith.constant 1.600000e+01 : f32
    %136 = vector.broadcast %cst_49 : f32 to vector<2x1xf32>
    %137 = arith.divf %135, %136 : vector<2x1xf32>
    %cst_50 = arith.constant 9.99999993E-9 : f32
    %138 = vector.broadcast %cst_50 : f32 to vector<2x1xf32>
    %139 = arith.addf %137, %138 : vector<2x1xf32>
    %140 = math.rsqrt %139 : vector<2x1xf32>
    %141 = vector.broadcast %140 : vector<2x1xf32> to vector<2x16xf32>
    %142 = arith.mulf %132, %141 : vector<2x16xf32>
    %cst_51 = arith.constant 0.000000e+00 : f32
    %143 = vector.broadcast %cst_51 : f32 to vector<2x16xf32>
    %144 = arith.cmpf oge, %142, %143 : vector<2x16xf32>
    %cst_52 = arith.constant 2.000000e-01 : f32
    %145 = vector.broadcast %cst_52 : f32 to vector<2x16xf32>
    %146 = arith.mulf %145, %142 : vector<2x16xf32>
    %147 = arith.select %144, %142, %146 : vector<2x16xi1>, vector<2x16xf32>
    %c0_53 = arith.constant 0 : index
    %c6 = arith.constant 6 : index
    %c0_54 = arith.constant 0 : index
    %148 = vector.load %arg4[%c0_53, %c6, %c0_54] : memref<2x16x16xf32, #tpu.memory_space<vmem>>, vector<2x1x16xf32>
    %149 = vector.shape_cast %148 : vector<2x1x16xf32> to vector<2x16xf32>
    %150 = vector.shape_cast %147 : vector<2x16xf32> to vector<2x1x16xf32>
    tpu.vector_store %arg4[%c0_53, %c6, %c0_54], %150 {strides = array<i32>} : memref<2x16x16xf32, #tpu.memory_space<vmem>>, vector<2x1x16xf32>,
    %151 = vector.extract_strided_slice %2 {offsets = [0, 112], sizes = [2, 16], strides = [1, 1]} : vector<2x256xf32> to vector<2x16xf32>
    %152 = vector.broadcast %3 : vector<1x16xf32> to vector<2x16xf32>
    %153 = arith.addf %151, %152 : vector<2x16xf32>
    %154 = arith.mulf %153, %153 : vector<2x16xf32>
    %cst_55 = arith.constant dense<0.000000e+00> : vector<2xf32>
    %155 = vector.multi_reduction <add>, %154, %cst_55 [1] : vector<2x16xf32> to vector<2xf32>
    %156 = vector.shape_cast %155 : vector<2xf32> to vector<2x1xf32>
    %cst_56 = arith.constant 1.600000e+01 : f32
    %157 = vector.broadcast %cst_56 : f32 to vector<2x1xf32>
    %158 = arith.divf %156, %157 : vector<2x1xf32>
    %cst_57 = arith.constant 9.99999993E-9 : f32
    %159 = vector.broadcast %cst_57 : f32 to vector<2x1xf32>
    %160 = arith.addf %158, %159 : vector<2x1xf32>
    %161 = math.rsqrt %160 : vector<2x1xf32>
    %162 = vector.broadcast %161 : vector<2x1xf32> to vector<2x16xf32>
    %163 = arith.mulf %153, %162 : vector<2x16xf32>
    %cst_58 = arith.constant 0.000000e+00 : f32
    %164 = vector.broadcast %cst_58 : f32 to vector<2x16xf32>
    %165 = arith.cmpf oge, %163, %164 : vector<2x16xf32>
    %cst_59 = arith.constant 2.000000e-01 : f32
    %166 = vector.broadcast %cst_59 : f32 to vector<2x16xf32>
    %167 = arith.mulf %166, %163 : vector<2x16xf32>
    %168 = arith.select %165, %163, %167 : vector<2x16xi1>, vector<2x16xf32>
    %c0_60 = arith.constant 0 : index
    %c7 = arith.constant 7 : index
    %c0_61 = arith.constant 0 : index
    %169 = vector.load %arg4[%c0_60, %c7, %c0_61] : memref<2x16x16xf32, #tpu.memory_space<vmem>>, vector<2x1x16xf32>
    %170 = vector.shape_cast %169 : vector<2x1x16xf32> to vector<2x16xf32>
    %171 = vector.shape_cast %168 : vector<2x16xf32> to vector<2x1x16xf32>
    tpu.vector_store %arg4[%c0_60, %c7, %c0_61], %171 {strides = array<i32>} : memref<2x16x16xf32, #tpu.memory_space<vmem>>, vector<2x1x16xf32>,
    %172 = vector.extract_strided_slice %2 {offsets = [0, 128], sizes = [2, 16], strides = [1, 1]} : vector<2x256xf32> to vector<2x16xf32>
    %173 = vector.broadcast %3 : vector<1x16xf32> to vector<2x16xf32>
    %174 = arith.addf %172, %173 : vector<2x16xf32>
    %175 = arith.mulf %174, %174 : vector<2x16xf32>
    %cst_62 = arith.constant dense<0.000000e+00> : vector<2xf32>
    %176 = vector.multi_reduction <add>, %175, %cst_62 [1] : vector<2x16xf32> to vector<2xf32>
    %177 = vector.shape_cast %176 : vector<2xf32> to vector<2x1xf32>
    %cst_63 = arith.constant 1.600000e+01 : f32
    %178 = vector.broadcast %cst_63 : f32 to vector<2x1xf32>
    %179 = arith.divf %177, %178 : vector<2x1xf32>
    %cst_64 = arith.constant 9.99999993E-9 : f32
    %180 = vector.broadcast %cst_64 : f32 to vector<2x1xf32>
    %181 = arith.addf %179, %180 : vector<2x1xf32>
    %182 = math.rsqrt %181 : vector<2x1xf32>
    %183 = vector.broadcast %182 : vector<2x1xf32> to vector<2x16xf32>
    %184 = arith.mulf %174, %183 : vector<2x16xf32>
    %cst_65 = arith.constant 0.000000e+00 : f32
    %185 = vector.broadcast %cst_65 : f32 to vector<2x16xf32>
    %186 = arith.cmpf oge, %184, %185 : vector<2x16xf32>
    %cst_66 = arith.constant 2.000000e-01 : f32
    %187 = vector.broadcast %cst_66 : f32 to vector<2x16xf32>
    %188 = arith.mulf %187, %184 : vector<2x16xf32>
    %189 = arith.select %186, %184, %188 : vector<2x16xi1>, vector<2x16xf32>
    %c0_67 = arith.constant 0 : index
    %c8 = arith.constant 8 : index
    %c0_68 = arith.constant 0 : index
    %190 = vector.load %arg4[%c0_67, %c8, %c0_68] : memref<2x16x16xf32, #tpu.memory_space<vmem>>, vector<2x1x16xf32>
    %191 = vector.shape_cast %190 : vector<2x1x16xf32> to vector<2x16xf32>
    %192 = vector.shape_cast %189 : vector<2x16xf32> to vector<2x1x16xf32>
    tpu.vector_store %arg4[%c0_67, %c8, %c0_68], %192 {strides = array<i32>} : memref<2x16x16xf32, #tpu.memory_space<vmem>>, vector<2x1x16xf32>,
    %193 = vector.extract_strided_slice %2 {offsets = [0, 144], sizes = [2, 16], strides = [1, 1]} : vector<2x256xf32> to vector<2x16xf32>
    %194 = vector.broadcast %3 : vector<1x16xf32> to vector<2x16xf32>
    %195 = arith.addf %193, %194 : vector<2x16xf32>
    %196 = arith.mulf %195, %195 : vector<2x16xf32>
    %cst_69 = arith.constant dense<0.000000e+00> : vector<2xf32>
    %197 = vector.multi_reduction <add>, %196, %cst_69 [1] : vector<2x16xf32> to vector<2xf32>
    %198 = vector.shape_cast %197 : vector<2xf32> to vector<2x1xf32>
    %cst_70 = arith.constant 1.600000e+01 : f32
    %199 = vector.broadcast %cst_70 : f32 to vector<2x1xf32>
    %200 = arith.divf %198, %199 : vector<2x1xf32>
    %cst_71 = arith.constant 9.99999993E-9 : f32
    %201 = vector.broadcast %cst_71 : f32 to vector<2x1xf32>
    %202 = arith.addf %200, %201 : vector<2x1xf32>
    %203 = math.rsqrt %202 : vector<2x1xf32>
    %204 = vector.broadcast %203 : vector<2x1xf32> to vector<2x16xf32>
    %205 = arith.mulf %195, %204 : vector<2x16xf32>
    %cst_72 = arith.constant 0.000000e+00 : f32
    %206 = vector.broadcast %cst_72 : f32 to vector<2x16xf32>
    %207 = arith.cmpf oge, %205, %206 : vector<2x16xf32>
    %cst_73 = arith.constant 2.000000e-01 : f32
    %208 = vector.broadcast %cst_73 : f32 to vector<2x16xf32>
    %209 = arith.mulf %208, %205 : vector<2x16xf32>
    %210 = arith.select %207, %205, %209 : vector<2x16xi1>, vector<2x16xf32>
    %c0_74 = arith.constant 0 : index
    %c9 = arith.constant 9 : index
    %c0_75 = arith.constant 0 : index
    %211 = vector.load %arg4[%c0_74, %c9, %c0_75] : memref<2x16x16xf32, #tpu.memory_space<vmem>>, vector<2x1x16xf32>
    %212 = vector.shape_cast %211 : vector<2x1x16xf32> to vector<2x16xf32>
    %213 = vector.shape_cast %210 : vector<2x16xf32> to vector<2x1x16xf32>
    tpu.vector_store %arg4[%c0_74, %c9, %c0_75], %213 {strides = array<i32>} : memref<2x16x16xf32, #tpu.memory_space<vmem>>, vector<2x1x16xf32>,
    %214 = vector.extract_strided_slice %2 {offsets = [0, 160], sizes = [2, 16], strides = [1, 1]} : vector<2x256xf32> to vector<2x16xf32>
    %215 = vector.broadcast %3 : vector<1x16xf32> to vector<2x16xf32>
    %216 = arith.addf %214, %215 : vector<2x16xf32>
    %217 = arith.mulf %216, %216 : vector<2x16xf32>
    %cst_76 = arith.constant dense<0.000000e+00> : vector<2xf32>
    %218 = vector.multi_reduction <add>, %217, %cst_76 [1] : vector<2x16xf32> to vector<2xf32>
    %219 = vector.shape_cast %218 : vector<2xf32> to vector<2x1xf32>
    %cst_77 = arith.constant 1.600000e+01 : f32
    %220 = vector.broadcast %cst_77 : f32 to vector<2x1xf32>
    %221 = arith.divf %219, %220 : vector<2x1xf32>
    %cst_78 = arith.constant 9.99999993E-9 : f32
    %222 = vector.broadcast %cst_78 : f32 to vector<2x1xf32>
    %223 = arith.addf %221, %222 : vector<2x1xf32>
    %224 = math.rsqrt %223 : vector<2x1xf32>
    %225 = vector.broadcast %224 : vector<2x1xf32> to vector<2x16xf32>
    %226 = arith.mulf %216, %225 : vector<2x16xf32>
    %cst_79 = arith.constant 0.000000e+00 : f32
    %227 = vector.broadcast %cst_79 : f32 to vector<2x16xf32>
    %228 = arith.cmpf oge, %226, %227 : vector<2x16xf32>
    %cst_80 = arith.constant 2.000000e-01 : f32
    %229 = vector.broadcast %cst_80 : f32 to vector<2x16xf32>
    %230 = arith.mulf %229, %226 : vector<2x16xf32>
    %231 = arith.select %228, %226, %230 : vector<2x16xi1>, vector<2x16xf32>
    %c0_81 = arith.constant 0 : index
    %c10 = arith.constant 10 : index
    %c0_82 = arith.constant 0 : index
    %232 = vector.load %arg4[%c0_81, %c10, %c0_82] : memref<2x16x16xf32, #tpu.memory_space<vmem>>, vector<2x1x16xf32>
    %233 = vector.shape_cast %232 : vector<2x1x16xf32> to vector<2x16xf32>
    %234 = vector.shape_cast %231 : vector<2x16xf32> to vector<2x1x16xf32>
    tpu.vector_store %arg4[%c0_81, %c10, %c0_82], %234 {strides = array<i32>} : memref<2x16x16xf32, #tpu.memory_space<vmem>>, vector<2x1x16xf32>,
    %235 = vector.extract_strided_slice %2 {offsets = [0, 176], sizes = [2, 16], strides = [1, 1]} : vector<2x256xf32> to vector<2x16xf32>
    %236 = vector.broadcast %3 : vector<1x16xf32> to vector<2x16xf32>
    %237 = arith.addf %235, %236 : vector<2x16xf32>
    %238 = arith.mulf %237, %237 : vector<2x16xf32>
    %cst_83 = arith.constant dense<0.000000e+00> : vector<2xf32>
    %239 = vector.multi_reduction <add>, %238, %cst_83 [1] : vector<2x16xf32> to vector<2xf32>
    %240 = vector.shape_cast %239 : vector<2xf32> to vector<2x1xf32>
    %cst_84 = arith.constant 1.600000e+01 : f32
    %241 = vector.broadcast %cst_84 : f32 to vector<2x1xf32>
    %242 = arith.divf %240, %241 : vector<2x1xf32>
    %cst_85 = arith.constant 9.99999993E-9 : f32
    %243 = vector.broadcast %cst_85 : f32 to vector<2x1xf32>
    %244 = arith.addf %242, %243 : vector<2x1xf32>
    %245 = math.rsqrt %244 : vector<2x1xf32>
    %246 = vector.broadcast %245 : vector<2x1xf32> to vector<2x16xf32>
    %247 = arith.mulf %237, %246 : vector<2x16xf32>
    %cst_86 = arith.constant 0.000000e+00 : f32
    %248 = vector.broadcast %cst_86 : f32 to vector<2x16xf32>
    %249 = arith.cmpf oge, %247, %248 : vector<2x16xf32>
    %cst_87 = arith.constant 2.000000e-01 : f32
    %250 = vector.broadcast %cst_87 : f32 to vector<2x16xf32>
    %251 = arith.mulf %250, %247 : vector<2x16xf32>
    %252 = arith.select %249, %247, %251 : vector<2x16xi1>, vector<2x16xf32>
    %c0_88 = arith.constant 0 : index
    %c11 = arith.constant 11 : index
    %c0_89 = arith.constant 0 : index
    %253 = vector.load %arg4[%c0_88, %c11, %c0_89] : memref<2x16x16xf32, #tpu.memory_space<vmem>>, vector<2x1x16xf32>
    %254 = vector.shape_cast %253 : vector<2x1x16xf32> to vector<2x16xf32>
    %255 = vector.shape_cast %252 : vector<2x16xf32> to vector<2x1x16xf32>
    tpu.vector_store %arg4[%c0_88, %c11, %c0_89], %255 {strides = array<i32>} : memref<2x16x16xf32, #tpu.memory_space<vmem>>, vector<2x1x16xf32>,
    %256 = vector.extract_strided_slice %2 {offsets = [0, 192], sizes = [2, 16], strides = [1, 1]} : vector<2x256xf32> to vector<2x16xf32>
    %257 = vector.broadcast %3 : vector<1x16xf32> to vector<2x16xf32>
    %258 = arith.addf %256, %257 : vector<2x16xf32>
    %259 = arith.mulf %258, %258 : vector<2x16xf32>
    %cst_90 = arith.constant dense<0.000000e+00> : vector<2xf32>
    %260 = vector.multi_reduction <add>, %259, %cst_90 [1] : vector<2x16xf32> to vector<2xf32>
    %261 = vector.shape_cast %260 : vector<2xf32> to vector<2x1xf32>
    %cst_91 = arith.constant 1.600000e+01 : f32
    %262 = vector.broadcast %cst_91 : f32 to vector<2x1xf32>
    %263 = arith.divf %261, %262 : vector<2x1xf32>
    %cst_92 = arith.constant 9.99999993E-9 : f32
    %264 = vector.broadcast %cst_92 : f32 to vector<2x1xf32>
    %265 = arith.addf %263, %264 : vector<2x1xf32>
    %266 = math.rsqrt %265 : vector<2x1xf32>
    %267 = vector.broadcast %266 : vector<2x1xf32> to vector<2x16xf32>
    %268 = arith.mulf %258, %267 : vector<2x16xf32>
    %cst_93 = arith.constant 0.000000e+00 : f32
    %269 = vector.broadcast %cst_93 : f32 to vector<2x16xf32>
    %270 = arith.cmpf oge, %268, %269 : vector<2x16xf32>
    %cst_94 = arith.constant 2.000000e-01 : f32
    %271 = vector.broadcast %cst_94 : f32 to vector<2x16xf32>
    %272 = arith.mulf %271, %268 : vector<2x16xf32>
    %273 = arith.select %270, %268, %272 : vector<2x16xi1>, vector<2x16xf32>
    %c0_95 = arith.constant 0 : index
    %c12 = arith.constant 12 : index
    %c0_96 = arith.constant 0 : index
    %274 = vector.load %arg4[%c0_95, %c12, %c0_96] : memref<2x16x16xf32, #tpu.memory_space<vmem>>, vector<2x1x16xf32>
    %275 = vector.shape_cast %274 : vector<2x1x16xf32> to vector<2x16xf32>
    %276 = vector.shape_cast %273 : vector<2x16xf32> to vector<2x1x16xf32>
    tpu.vector_store %arg4[%c0_95, %c12, %c0_96], %276 {strides = array<i32>} : memref<2x16x16xf32, #tpu.memory_space<vmem>>, vector<2x1x16xf32>,
    %277 = vector.extract_strided_slice %2 {offsets = [0, 208], sizes = [2, 16], strides = [1, 1]} : vector<2x256xf32> to vector<2x16xf32>
    %278 = vector.broadcast %3 : vector<1x16xf32> to vector<2x16xf32>
    %279 = arith.addf %277, %278 : vector<2x16xf32>
    %280 = arith.mulf %279, %279 : vector<2x16xf32>
    %cst_97 = arith.constant dense<0.000000e+00> : vector<2xf32>
    %281 = vector.multi_reduction <add>, %280, %cst_97 [1] : vector<2x16xf32> to vector<2xf32>
    %282 = vector.shape_cast %281 : vector<2xf32> to vector<2x1xf32>
    %cst_98 = arith.constant 1.600000e+01 : f32
    %283 = vector.broadcast %cst_98 : f32 to vector<2x1xf32>
    %284 = arith.divf %282, %283 : vector<2x1xf32>
    %cst_99 = arith.constant 9.99999993E-9 : f32
    %285 = vector.broadcast %cst_99 : f32 to vector<2x1xf32>
    %286 = arith.addf %284, %285 : vector<2x1xf32>
    %287 = math.rsqrt %286 : vector<2x1xf32>
    %288 = vector.broadcast %287 : vector<2x1xf32> to vector<2x16xf32>
    %289 = arith.mulf %279, %288 : vector<2x16xf32>
    %cst_100 = arith.constant 0.000000e+00 : f32
    %290 = vector.broadcast %cst_100 : f32 to vector<2x16xf32>
    %291 = arith.cmpf oge, %289, %290 : vector<2x16xf32>
    %cst_101 = arith.constant 2.000000e-01 : f32
    %292 = vector.broadcast %cst_101 : f32 to vector<2x16xf32>
    %293 = arith.mulf %292, %289 : vector<2x16xf32>
    %294 = arith.select %291, %289, %293 : vector<2x16xi1>, vector<2x16xf32>
    %c0_102 = arith.constant 0 : index
    %c13 = arith.constant 13 : index
    %c0_103 = arith.constant 0 : index
    %295 = vector.load %arg4[%c0_102, %c13, %c0_103] : memref<2x16x16xf32, #tpu.memory_space<vmem>>, vector<2x1x16xf32>
    %296 = vector.shape_cast %295 : vector<2x1x16xf32> to vector<2x16xf32>
    %297 = vector.shape_cast %294 : vector<2x16xf32> to vector<2x1x16xf32>
    tpu.vector_store %arg4[%c0_102, %c13, %c0_103], %297 {strides = array<i32>} : memref<2x16x16xf32, #tpu.memory_space<vmem>>, vector<2x1x16xf32>,
    %298 = vector.extract_strided_slice %2 {offsets = [0, 224], sizes = [2, 16], strides = [1, 1]} : vector<2x256xf32> to vector<2x16xf32>
    %299 = vector.broadcast %3 : vector<1x16xf32> to vector<2x16xf32>
    %300 = arith.addf %298, %299 : vector<2x16xf32>
    %301 = arith.mulf %300, %300 : vector<2x16xf32>
    %cst_104 = arith.constant dense<0.000000e+00> : vector<2xf32>
    %302 = vector.multi_reduction <add>, %301, %cst_104 [1] : vector<2x16xf32> to vector<2xf32>
    %303 = vector.shape_cast %302 : vector<2xf32> to vector<2x1xf32>
    %cst_105 = arith.constant 1.600000e+01 : f32
    %304 = vector.broadcast %cst_105 : f32 to vector<2x1xf32>
    %305 = arith.divf %303, %304 : vector<2x1xf32>
    %cst_106 = arith.constant 9.99999993E-9 : f32
    %306 = vector.broadcast %cst_106 : f32 to vector<2x1xf32>
    %307 = arith.addf %305, %306 : vector<2x1xf32>
    %308 = math.rsqrt %307 : vector<2x1xf32>
    %309 = vector.broadcast %308 : vector<2x1xf32> to vector<2x16xf32>
    %310 = arith.mulf %300, %309 : vector<2x16xf32>
    %cst_107 = arith.constant 0.000000e+00 : f32
    %311 = vector.broadcast %cst_107 : f32 to vector<2x16xf32>
    %312 = arith.cmpf oge, %310, %311 : vector<2x16xf32>
    %cst_108 = arith.constant 2.000000e-01 : f32
    %313 = vector.broadcast %cst_108 : f32 to vector<2x16xf32>
    %314 = arith.mulf %313, %310 : vector<2x16xf32>
    %315 = arith.select %312, %310, %314 : vector<2x16xi1>, vector<2x16xf32>
    %c0_109 = arith.constant 0 : index
    %c14 = arith.constant 14 : index
    %c0_110 = arith.constant 0 : index
    %316 = vector.load %arg4[%c0_109, %c14, %c0_110] : memref<2x16x16xf32, #tpu.memory_space<vmem>>, vector<2x1x16xf32>
    %317 = vector.shape_cast %316 : vector<2x1x16xf32> to vector<2x16xf32>
    %318 = vector.shape_cast %315 : vector<2x16xf32> to vector<2x1x16xf32>
    tpu.vector_store %arg4[%c0_109, %c14, %c0_110], %318 {strides = array<i32>} : memref<2x16x16xf32, #tpu.memory_space<vmem>>, vector<2x1x16xf32>,
    %319 = vector.extract_strided_slice %2 {offsets = [0, 240], sizes = [2, 16], strides = [1, 1]} : vector<2x256xf32> to vector<2x16xf32>
    %320 = vector.broadcast %3 : vector<1x16xf32> to vector<2x16xf32>
    %321 = arith.addf %319, %320 : vector<2x16xf32>
    %322 = arith.mulf %321, %321 : vector<2x16xf32>
    %cst_111 = arith.constant dense<0.000000e+00> : vector<2xf32>
    %323 = vector.multi_reduction <add>, %322, %cst_111 [1] : vector<2x16xf32> to vector<2xf32>
    %324 = vector.shape_cast %323 : vector<2xf32> to vector<2x1xf32>
    %cst_112 = arith.constant 1.600000e+01 : f32
    %325 = vector.broadcast %cst_112 : f32 to vector<2x1xf32>
    %326 = arith.divf %324, %325 : vector<2x1xf32>
    %cst_113 = arith.constant 9.99999993E-9 : f32
    %327 = vector.broadcast %cst_113 : f32 to vector<2x1xf32>
    %328 = arith.addf %326, %327 : vector<2x1xf32>
    %329 = math.rsqrt %328 : vector<2x1xf32>
    %330 = vector.broadcast %329 : vector<2x1xf32> to vector<2x16xf32>
    %331 = arith.mulf %321, %330 : vector<2x16xf32>
    %cst_114 = arith.constant 0.000000e+00 : f32
    %332 = vector.broadcast %cst_114 : f32 to vector<2x16xf32>
    %333 = arith.cmpf oge, %331, %332 : vector<2x16xf32>
    %cst_115 = arith.constant 2.000000e-01 : f32
    %334 = vector.broadcast %cst_115 : f32 to vector<2x16xf32>
    %335 = arith.mulf %334, %331 : vector<2x16xf32>
    %336 = arith.select %333, %331, %335 : vector<2x16xi1>, vector<2x16xf32>
    %c0_116 = arith.constant 0 : index
    %c15 = arith.constant 15 : index
    %c0_117 = arith.constant 0 : index
    %337 = vector.load %arg4[%c0_116, %c15, %c0_117] : memref<2x16x16xf32, #tpu.memory_space<vmem>>, vector<2x1x16xf32>
    %338 = vector.shape_cast %337 : vector<2x1x16xf32> to vector<2x16xf32>
    %339 = vector.shape_cast %336 : vector<2x16xf32> to vector<2x1x16xf32>
    tpu.vector_store %arg4[%c0_116, %c15, %c0_117], %339 {strides = array<i32>} : memref<2x16x16xf32, #tpu.memory_space<vmem>>, vector<2x1x16xf32>,
    return
  }
  func.func @transform_0(%arg0: i32) -> (i32, i32) {
    %c0_i32 = arith.constant 0 : i32
    %c0_i32_0 = arith.constant 0 : i32
    %c0_i32_1 = arith.constant 0 : i32
    return %c0_i32, %c0_i32_0 : i32, i32
  }
  func.func @transform_1(%arg0: i32) -> (i32, i32) {
    %c0_i32 = arith.constant 0 : i32
    %c0_i32_0 = arith.constant 0 : i32
    %c0_i32_1 = arith.constant 0 : i32
    return %c0_i32, %c0_i32_0 : i32, i32
  }
  func.func @transform_2(%arg0: i32) -> (i32, i32) {
    %c0_i32 = arith.constant 0 : i32
    %c0_i32_0 = arith.constant 0 : i32
    %c0_i32_1 = arith.constant 0 : i32
    return %c0_i32, %c0_i32_0 : i32, i32
  }
  func.func @transform_3(%arg0: i32) -> (i32, i32, i32) {
    %c0_i32 = arith.constant 0 : i32
    %c0_i32_0 = arith.constant 0 : i32
    %c0_i32_1 = arith.constant 0 : i32
    %c0_i32_2 = arith.constant 0 : i32
    return %c0_i32, %c0_i32_0, %c0_i32_1 : i32, i32, i32
  }
}

</mosaic_0001>

<llo_original>
// kernel: tpu_custom_call.1
$region0: #{tpu_custom_call.1}
  #allocation0 [shape = 'u32[]', space=smem, size = 0x4, offset = 0x4, fixed_abs, tag = 'smem constant byte address 0x4 - core index']
  #allocation1 [shape = 'u32[144,128]{1,0:T(1,128)}', space=vmem, size = 0x12000, scoped, tag = 'internal scratch']
  %s0 = inlined_call_operand.hbm [shape: f32[2,8], index: 0, kind: input, shape index: {}]
  %s1 = inlined_call_operand.hbm [shape: f32[8,256], index: 1, kind: input, shape index: {}]
  %s2 = inlined_call_operand.vmem [shape: f32[1,16], index: 2, kind: input, shape index: {}]
  %s3 = inlined_call_operand.hbm [shape: f32[2,16,16], index: 3, kind: output, shape index: {}]
  %s4 = sld [smem:[#allocation0]]
  $region30: #{tpu_custom_call.1} parent=0
    _
  %s6 = ssub.s32 1, %s4
  %s7 = scalar_select 0, %s6, %s4
  $region1: #{tpu_custom_call.1} parent=0
    #allocation2 [shape = 'u8[1024]{0}', space=vmem, size = 0x400, scoped, tag = 'input window, operand 0, single buffered']
    #allocation3 [shape = 's32[1]{0}', space=sflag, size = 0x4, scoped, tag = 'scoped memory for tpu_custom_call.1']
    #allocation4 [shape = 's32[1]{0}', space=sflag, size = 0x4, scoped, tag = 'scoped memory for tpu_custom_call.1']
    #allocation5 [shape = 'u8[8192]{0}', space=vmem, size = 0x2000, scoped, tag = 'input window, operand 1, single buffered']
    #allocation6 [shape = 's32[1]{0}', space=sflag, size = 0x4, scoped, tag = 'scoped memory for tpu_custom_call.1']
    #allocation7 [shape = 'u8[16384]{0}', space=vmem, size = 0x4000, scoped, tag = 'output window, operand 0, single buffered']
    %8 = vsyncpa [#allocation3], 0
    %9 = vsyncpa [#allocation6], 0
    %10 = vsyncpa [#allocation4], 0
    // Predicated region
    $region2: #{tpu_custom_call.1} parent=1 // pred_check
      _
    $region3: #{tpu_custom_call.1} parent=1 // pred_check_branch
      %12 = sbr.rel (0) target = $region5
    $region4: #{tpu_custom_call.1} parent=1 // pred_region
      %s14 = ssub.s32 32, 32
      %15 = vsyncadd [#allocation3], %s14
      %s17 = sshll.u32 [#allocation2], 4
      %s18 = int_to_ptr.vmem [resolvable:$true] %s17
      %20 = dma.hbm_to_vmem [thread:$0]  %s0, 32, %s18, [#allocation3]
    $region5: #{tpu_custom_call.1} parent=1 // pred_fallthru
      _
    // Predicated region
    $region6: #{tpu_custom_call.1} parent=1 // pred_check
      _
    $region7: #{tpu_custom_call.1} parent=1 // pred_check_branch
      %22 = sbr.rel (0) target = $region9
    $region8: #{tpu_custom_call.1} parent=1 // pred_region
      %s24 = ssub.s32 256, 256
      %25 = vsyncadd [#allocation6], %s24
      %s27 = sshll.u32 [#allocation5], 4
      %s28 = int_to_ptr.vmem [resolvable:$true] %s27
      %30 = dma.hbm_to_vmem [thread:$0]  %s1, 256, %s28, [#allocation6]
    $region9: #{tpu_custom_call.1} parent=1 // pred_fallthru
      _
    // Predicated region
    $region10: #{tpu_custom_call.1} parent=1 // pred_check
      _
    $region11: #{tpu_custom_call.1} parent=1 // pred_check_branch
      %32 = sbr.rel (0) target = $region13
    $region12: #{tpu_custom_call.1} parent=1 // pred_region
      _
    $region13: #{tpu_custom_call.1} parent=1 // pred_fallthru
      _
    // Predicated region
    $region14: #{tpu_custom_call.1} parent=1 // pred_check
      _
    $region15: #{tpu_custom_call.1} parent=1 // pred_check_branch
      %34 = sbr.rel (0) target = $region17
    $region16: #{tpu_custom_call.1} parent=1 // pred_region
      %35 = dma.done [#allocation3], 32
    $region17: #{tpu_custom_call.1} parent=1 // pred_fallthru
      _
    // Predicated region
    $region18: #{tpu_custom_call.1} parent=1 // pred_check
      _
    $region19: #{tpu_custom_call.1} parent=1 // pred_check_branch
      %37 = sbr.rel (0) target = $region21
    $region20: #{tpu_custom_call.1} parent=1 // pred_region
      %38 = dma.done [#allocation6], 256
    $region21: #{tpu_custom_call.1} parent=1 // pred_fallthru
      _
    %v39 = vld [vmem:[#allocation2] sm:$0x3]
    %v40 = vld [vmem:[#allocation5] sm:$0xff]
    %v41 = vld [vmem:[#allocation5 + $0x8] sm:$0xff]
    %vm42 = vcmask 64512
    %v44 = vsel %vm42, %v39, 0
    %46 = vmatprep.subr.mxu0 0.0
    %47 = vmatpush1.msra.mxu0 0.0
    %48 = vmatprep.subr.mxu0 0.0
    %49 = vmatpush1.msra.mxu0 0.0
    %50 = vmatprep.subr.mxu0 0.0
    %51 = vmatpush1.msra.mxu0 0.0
    %52 = vmatprep.subr.mxu0 0.0
    %53 = vmatpush1.msra.mxu0 0.0
    %54 = vmatprep.subr.mxu0 0.0
    %55 = vmatpush1.msra.mxu0 0.0
    %56 = vmatprep.subr.mxu0 0.0
    %57 = vmatpush1.msra.mxu0 0.0
    %58 = vmatprep.subr.mxu0 0.0
    %59 = vmatpush1.msra.mxu0 0.0
    %60 = vmatprep.subr.mxu0 0.0
    %61 = vmatpush1.msra.mxu0 0.0
    %62 = vmatprep.subr.mxu0 0.0
    %63 = vmatpush1.msra.mxu0 0.0
    %64 = vmatprep.subr.mxu0 0.0
    %65 = vmatpush1.msra.mxu0 0.0
    %66 = vmatprep.subr.mxu0 0.0
    %67 = vmatpush1.msra.mxu0 0.0
    %68 = vmatprep.subr.mxu0 0.0
    %69 = vmatpush1.msra.mxu0 0.0
    %70 = vmatprep.subr.mxu0 0.0
    %71 = vmatpush1.msra.mxu0 0.0
    %72 = vmatprep.subr.mxu0 0.0
    %73 = vmatpush1.msra.mxu0 0.0
    %74 = vmatprep.subr.mxu0 0.0
    %75 = vmatpush1.msra.mxu0 0.0
    %76 = vmatprep.subr.mxu0 %v41
    %77 = vmatpush1.msra.mxu0 %v40
    %78 = vmatprep.subr.mxu0 0.0
    %79 = vmatpush2.msra.mxu0 0.0
    %80 = vmatprep.subr.mxu0 0.0
    %81 = vmatpush2.msra.mxu0 0.0
    %82 = vmatprep.subr.mxu0 0.0
    %83 = vmatpush2.msra.mxu0 0.0
    %84 = vmatprep.subr.mxu0 0.0
    %85 = vmatpush2.msra.mxu0 0.0
    %86 = vmatprep.subr.mxu0 0.0
    %87 = vmatpush2.msra.mxu0 0.0
    %88 = vmatprep.subr.mxu0 0.0
    %89 = vmatpush2.msra.mxu0 0.0
    %90 = vmatprep.subr.mxu0 0.0
    %91 = vmatpush2.msra.mxu0 0.0
    %92 = vmatprep.subr.mxu0 0.0
    %93 = vmatpush2.msra.mxu0 0.0
    %94 = vmatprep.subr.mxu0 0.0
    %95 = vmatpush2.msra.mxu0 0.0
    %96 = vmatprep.subr.mxu0 0.0
    %97 = vmatpush2.msra.mxu0 0.0
    %98 = vmatprep.subr.mxu0 0.0
    %99 = vmatpush2.msra.mxu0 0.0
    %100 = vmatprep.subr.mxu0 0.0
    %101 = vmatpush2.msra.mxu0 0.0
    %102 = vmatprep.subr.mxu0 0.0
    %103 = vmatpush2.msra.mxu0 0.0
    %104 = vmatprep.subr.mxu0 0.0
    %105 = vmatpush2.msra.mxu0 0.0
    %106 = vmatprep.subr.mxu0 0.0
    %107 = vmatpush2.msra.mxu0 0.0
    %108 = vmatprep.subr.mxu0 0.0
    %109 = vmatpush2.msra.mxu0 0.0
    %110 = vmatprep.mubr.f32.mxu0 0.0
    %111 = vmatmul.mubr.f32.gmra.mxu0 %v44
    %v112 = vpop.f32.mrf.mxu0
    %v113 = vadd.f32 0.0, %v112
    %v114 = vpop.f32.mrf.mxu0
    %v115 = vadd.f32 0.0, %v114
    %116 = vdwg.mxu0
    %v117 = vld [vmem:[%s2] sm:$0x1]
    %v119 = vlaneseq
    %v120 = vshrl.u32 %v119, 7
    %v121 = vsub.s32 0, %v120
    %v122 = vrot.slane %v117, %v121
    %v124 = vadd.f32 %v113, %v122
    %v125 = vmul.f32 %v124, %v124
    %vm126 = vcmask 123904
    %v127 = vsel %vm126, %v125, 0.0
    %128 = vadd.xlane.f32.xlu0 %v127
    %v129 = vpop.xlane.xlu0 %128
    %v130 = vrcp.pop 16.0
    %v131 = vmul.f32 %v129, %v130
    %v132 = vadd.f32 %v131, 1e-08
    %v133 = vrsqrt.pop %v132
    %v134 = vmul.f32 %v124, %v133
    %vm135 = vcmp.ge.f32.partialorder %v134, 0.0
    %v136 = vmul.f32 %v134, 0.2
    %v137 = vsel %vm135, %v134, %v136
    %v140 = vunpack.c.l.s4 1966171168
    %v141 = vunpack.c.0.s8 %v140
    %v142 = vlaneseq
    %v143 = vshrl.u32 %v142, 7
    %v144 = vsub.s32 %v141, %v143
    %v145 = vrot.slane %v137, %v144
    %v146 = vcombine.high %v145, %v145
    %v148 = vunpack.c.l.s4 1966171168
    %v149 = vunpack.c.0.s8 %v148
    %v150 = vlaneseq
    %v151 = vshrl.u32 %v150, 7
    %v152 = vsub.s32 %v149, %v151
    %v153 = vrot.slane %v145, %v152
    %v155 = vunpack.c.l.s4 1966171168
    %v156 = vunpack.c.0.s8 %v155
    %v157 = vlaneseq
    %v158 = vshrl.u32 %v157, 7
    %v159 = vsub.s32 %v156, %v158
    %v160 = vrot.slane %v146, %v159
    %vm163 = vcmask 122880
    %164 = vst.msk [vmem:[#allocation7] sm:$0x1] %vm163, %v153
    %165 = vst.msk [vmem:[#allocation7 + $0x10] sm:$0x1] %vm163, %v160
    %166 = vrot.lane.b32.xlu0 %v122, 16
    %v167 = vpop.permute.xlu0 %166
    %v169 = vadd.f32 %v113, %v167
    %v170 = vmul.f32 %v169, %v169
    %172 = vrot.lane.b32.xlu0 %v170, 112
    %v173 = vpop.permute.xlu0 %172
    %v175 = vsel %vm126, %v173, 0.0
    %176 = vadd.xlane.f32.xlu0 %v175
    %v177 = vpop.xlane.xlu0 %176
    %v178 = vmul.f32 %v177, %v130
    %v179 = vadd.f32 %v178, 1e-08
    %v180 = vrsqrt.pop %v179
    %v181 = vmul.f32 %v169, %v180
    %vm182 = vcmp.ge.f32.partialorder %v181, 0.0
    %v183 = vmul.f32 %v181, 0.2
    %v184 = vsel %vm182, %v181, %v183
    %v187 = vunpack.c.l.s4 1966171168
    %v188 = vunpack.c.0.s8 %v187
    %v189 = vlaneseq
    %v190 = vshrl.u32 %v189, 7
    %v191 = vsub.s32 %v188, %v190
    %v192 = vrot.slane %v184, %v191
    %v193 = vcombine.high %v192, %v192
    %v195 = vunpack.c.l.s4 1966171168
    %v196 = vunpack.c.0.s8 %v195
    %v197 = vlaneseq
    %v198 = vshrl.u32 %v197, 7
    %v199 = vsub.s32 %v196, %v198
    %v200 = vrot.slane %v192, %v199
    %v202 = vunpack.c.l.s4 1966171168
    %v203 = vunpack.c.0.s8 %v202
    %v204 = vlaneseq
    %v205 = vshrl.u32 %v204, 7
    %v206 = vsub.s32 %v203, %v205
    %v207 = vrot.slane %v193, %v206
    %v208 = vlaneseq
    %v209 = vshrl.u32 %v208, 7
    %v210 = vsub.s32 0, %v209
    %v211 = vrot.slane %v200, %v210
    %v212 = vlaneseq
    %v213 = vshrl.u32 %v212, 7
    %v214 = vsub.s32 0, %v213
    %v215 = vrot.slane %v207, %v214
    %216 = vrot.lane.b32.xlu0 %v211, 112
    %v217 = vpop.permute.xlu0 %216
    %218 = vrot.lane.b32.xlu0 %v215, 112
    %v219 = vpop.permute.xlu0 %218
    %222 = vst.msk [vmem:[#allocation7 + $0x1] sm:$0x1] %vm163, %v217
    %223 = vst.msk [vmem:[#allocation7 + $0x11] sm:$0x1] %vm163, %v219
    %224 = vrot.lane.b32.xlu0 %v122, 32
    %v225 = vpop.permute.xlu0 %224
    %v227 = vadd.f32 %v113, %v225
    %v228 = vmul.f32 %v227, %v227
    %230 = vrot.lane.b32.xlu0 %v228, 96
    %v231 = vpop.permute.xlu0 %230
    %v233 = vsel %vm126, %v231, 0.0
    %234 = vadd.xlane.f32.xlu0 %v233
    %v235 = vpop.xlane.xlu0 %234
    %v236 = vmul.f32 %v235, %v130
    %v237 = vadd.f32 %v236, 1e-08
    %v238 = vrsqrt.pop %v237
    %v239 = vmul.f32 %v227, %v238
    %vm240 = vcmp.ge.f32.partialorder %v239, 0.0
    %v241 = vmul.f32 %v239, 0.2
    %v242 = vsel %vm240, %v239, %v241
    %v245 = vunpack.c.l.s4 1966171168
    %v246 = vunpack.c.0.s8 %v245
    %v247 = vlaneseq
    %v248 = vshrl.u32 %v247, 7
    %v249 = vsub.s32 %v246, %v248
    %v250 = vrot.slane %v242, %v249
    %v251 = vcombine.high %v250, %v250
    %v253 = vunpack.c.l.s4 1966171168
    %v254 = vunpack.c.0.s8 %v253
    %v255 = vlaneseq
    %v256 = vshrl.u32 %v255, 7
    %v257 = vsub.s32 %v254, %v256
    %v258 = vrot.slane %v250, %v257
    %v260 = vunpack.c.l.s4 1966171168
    %v261 = vunpack.c.0.s8 %v260
    %v262 = vlaneseq
    %v263 = vshrl.u32 %v262, 7
    %v264 = vsub.s32 %v261, %v263
    %v265 = vrot.slane %v251, %v264
    %v266 = vlaneseq
    %v267 = vshrl.u32 %v266, 7
    %v268 = vsub.s32 0, %v267
    %v269 = vrot.slane %v258, %v268
    %v270 = vlaneseq
    %v271 = vshrl.u32 %v270, 7
    %v272 = vsub.s32 0, %v271
    %v273 = vrot.slane %v265, %v272
    %274 = vrot.lane.b32.xlu0 %v269, 96
    %v275 = vpop.permute.xlu0 %274
    %276 = vrot.lane.b32.xlu0 %v273, 96
    %v277 = vpop.permute.xlu0 %276
    %280 = vst.msk [vmem:[#allocation7 + $0x2] sm:$0x1] %vm163, %v275
    %281 = vst.msk [vmem:[#allocation7 + $0x12] sm:$0x1] %vm163, %v277
    %282 = vrot.lane.b32.xlu0 %v122, 48
    %v283 = vpop.permute.xlu0 %282
    %v285 = vadd.f32 %v113, %v283
    %v286 = vmul.f32 %v285, %v285
    %288 = vrot.lane.b32.xlu0 %v286, 80
    %v289 = vpop.permute.xlu0 %288
    %v291 = vsel %vm126, %v289, 0.0
    %292 = vadd.xlane.f32.xlu0 %v291
    %v293 = vpop.xlane.xlu0 %292
    %v294 = vmul.f32 %v293, %v130
    %v295 = vadd.f32 %v294, 1e-08
    %v296 = vrsqrt.pop %v295
    %v297 = vmul.f32 %v285, %v296
    %vm298 = vcmp.ge.f32.partialorder %v297, 0.0
    %v299 = vmul.f32 %v297, 0.2
    %v300 = vsel %vm298, %v297, %v299
    %v303 = vunpack.c.l.s4 1966171168
    %v304 = vunpack.c.0.s8 %v303
    %v305 = vlaneseq
    %v306 = vshrl.u32 %v305, 7
    %v307 = vsub.s32 %v304, %v306
    %v308 = vrot.slane %v300, %v307
    %v309 = vcombine.high %v308, %v308
    %v311 = vunpack.c.l.s4 1966171168
    %v312 = vunpack.c.0.s8 %v311
    %v313 = vlaneseq
    %v314 = vshrl.u32 %v313, 7
    %v315 = vsub.s32 %v312, %v314
    %v316 = vrot.slane %v308, %v315
    %v318 = vunpack.c.l.s4 1966171168
    %v319 = vunpack.c.0.s8 %v318
    %v320 = vlaneseq
    %v321 = vshrl.u32 %v320, 7
    %v322 = vsub.s32 %v319, %v321
    %v323 = vrot.slane %v309, %v322
    %v324 = vlaneseq
    %v325 = vshrl.u32 %v324, 7
    %v326 = vsub.s32 0, %v325
    %v327 = vrot.slane %v316, %v326
    %v328 = vlaneseq
    %v329 = vshrl.u32 %v328, 7
    %v330 = vsub.s32 0, %v329
    %v331 = vrot.slane %v323, %v330
    %332 = vrot.lane.b32.xlu0 %v327, 80
    %v333 = vpop.permute.xlu0 %332
    %334 = vrot.lane.b32.xlu0 %v331, 80
    %v335 = vpop.permute.xlu0 %334
    %338 = vst.msk [vmem:[#allocation7 + $0x3] sm:$0x1] %vm163, %v333
    %339 = vst.msk [vmem:[#allocation7 + $0x13] sm:$0x1] %vm163, %v335
    %340 = vrot.lane.b32.xlu0 %v122, 64
    %v341 = vpop.permute.xlu0 %340
    %v343 = vadd.f32 %v113, %v341
    %v344 = vmul.f32 %v343, %v343
    %346 = vrot.lane.b32.xlu0 %v344, 64
    %v347 = vpop.permute.xlu0 %346
    %v349 = vsel %vm126, %v347, 0.0
    %350 = vadd.xlane.f32.xlu0 %v349
    %v351 = vpop.xlane.xlu0 %350
    %v352 = vmul.f32 %v351, %v130
    %v353 = vadd.f32 %v352, 1e-08
    %v354 = vrsqrt.pop %v353
    %v355 = vmul.f32 %v343, %v354
    %vm356 = vcmp.ge.f32.partialorder %v355, 0.0
    %v357 = vmul.f32 %v355, 0.2
    %v358 = vsel %vm356, %v355, %v357
    %v361 = vunpack.c.l.s4 1966171168
    %v362 = vunpack.c.0.s8 %v361
    %v363 = vlaneseq
    %v364 = vshrl.u32 %v363, 7
    %v365 = vsub.s32 %v362, %v364
    %v366 = vrot.slane %v358, %v365
    %v367 = vcombine.high %v366, %v366
    %v369 = vunpack.c.l.s4 1966171168
    %v370 = vunpack.c.0.s8 %v369
    %v371 = vlaneseq
    %v372 = vshrl.u32 %v371, 7
    %v373 = vsub.s32 %v370, %v372
    %v374 = vrot.slane %v366, %v373
    %v376 = vunpack.c.l.s4 1966171168
    %v377 = vunpack.c.0.s8 %v376
    %v378 = vlaneseq
    %v379 = vshrl.u32 %v378, 7
    %v380 = vsub.s32 %v377, %v379
    %v381 = vrot.slane %v367, %v380
    %v382 = vlaneseq
    %v383 = vshrl.u32 %v382, 7
    %v384 = vsub.s32 0, %v383
    %v385 = vrot.slane %v374, %v384
    %v386 = vlaneseq
    %v387 = vshrl.u32 %v386, 7
    %v388 = vsub.s32 0, %v387
    %v389 = vrot.slane %v381, %v388
    %390 = vrot.lane.b32.xlu0 %v385, 64
    %v391 = vpop.permute.xlu0 %390
    %392 = vrot.lane.b32.xlu0 %v389, 64
    %v393 = vpop.permute.xlu0 %392
    %396 = vst.msk [vmem:[#allocation7 + $0x4] sm:$0x1] %vm163, %v391
    %397 = vst.msk [vmem:[#allocation7 + $0x14] sm:$0x1] %vm163, %v393
    %398 = vrot.lane.b32.xlu0 %v122, 80
    %v399 = vpop.permute.xlu0 %398
    %v401 = vadd.f32 %v113, %v399
    %v402 = vmul.f32 %v401, %v401
    %404 = vrot.lane.b32.xlu0 %v402, 48
    %v405 = vpop.permute.xlu0 %404
    %v407 = vsel %vm126, %v405, 0.0
    %408 = vadd.xlane.f32.xlu0 %v407
    %v409 = vpop.xlane.xlu0 %408
    %v410 = vmul.f32 %v409, %v130
    %v411 = vadd.f32 %v410, 1e-08
    %v412 = vrsqrt.pop %v411
    %v413 = vmul.f32 %v401, %v412
    %vm414 = vcmp.ge.f32.partialorder %v413, 0.0
    %v415 = vmul.f32 %v413, 0.2
    %v416 = vsel %vm414, %v413, %v415
    %v419 = vunpack.c.l.s4 1966171168
    %v420 = vunpack.c.0.s8 %v419
    %v421 = vlaneseq
    %v422 = vshrl.u32 %v421, 7
    %v423 = vsub.s32 %v420, %v422
    %v424 = vrot.slane %v416, %v423
    %v425 = vcombine.high %v424, %v424
    %v427 = vunpack.c.l.s4 1966171168
    %v428 = vunpack.c.0.s8 %v427
    %v429 = vlaneseq
    %v430 = vshrl.u32 %v429, 7
    %v431 = vsub.s32 %v428, %v430
    %v432 = vrot.slane %v424, %v431
    %v434 = vunpack.c.l.s4 1966171168
    %v435 = vunpack.c.0.s8 %v434
    %v436 = vlaneseq
    %v437 = vshrl.u32 %v436, 7
    %v438 = vsub.s32 %v435, %v437
    %v439 = vrot.slane %v425, %v438
    %v440 = vlaneseq
    %v441 = vshrl.u32 %v440, 7
    %v442 = vsub.s32 0, %v441
    %v443 = vrot.slane %v432, %v442
    %v444 = vlaneseq
    %v445 = vshrl.u32 %v444, 7
    %v446 = vsub.s32 0, %v445
    %v447 = vrot.slane %v439, %v446
    %448 = vrot.lane.b32.xlu0 %v443, 48
    %v449 = vpop.permute.xlu0 %448
    %450 = vrot.lane.b32.xlu0 %v447, 48
    %v451 = vpop.permute.xlu0 %450
    %454 = vst.msk [vmem:[#allocation7 + $0x5] sm:$0x1] %vm163, %v449
    %455 = vst.msk [vmem:[#allocation7 + $0x15] sm:$0x1] %vm163, %v451
    %456 = vrot.lane.b32.xlu0 %v122, 96
    %v457 = vpop.permute.xlu0 %456
    %v459 = vadd.f32 %v113, %v457
    %v460 = vmul.f32 %v459, %v459
    %462 = vrot.lane.b32.xlu0 %v460, 32
    %v463 = vpop.permute.xlu0 %462
    %v465 = vsel %vm126, %v463, 0.0
    %466 = vadd.xlane.f32.xlu0 %v465
    %v467 = vpop.xlane.xlu0 %466
    %v468 = vmul.f32 %v467, %v130
    %v469 = vadd.f32 %v468, 1e-08
    %v470 = vrsqrt.pop %v469
    %v471 = vmul.f32 %v459, %v470
    %vm472 = vcmp.ge.f32.partialorder %v471, 0.0
    %v473 = vmul.f32 %v471, 0.2
    %v474 = vsel %vm472, %v471, %v473
    %v477 = vunpack.c.l.s4 1966171168
    %v478 = vunpack.c.0.s8 %v477
    %v479 = vlaneseq
    %v480 = vshrl.u32 %v479, 7
    %v481 = vsub.s32 %v478, %v480
    %v482 = vrot.slane %v474, %v481
    %v483 = vcombine.high %v482, %v482
    %v485 = vunpack.c.l.s4 1966171168
    %v486 = vunpack.c.0.s8 %v485
    %v487 = vlaneseq
    %v488 = vshrl.u32 %v487, 7
    %v489 = vsub.s32 %v486, %v488
    %v490 = vrot.slane %v482, %v489
    %v492 = vunpack.c.l.s4 1966171168
    %v493 = vunpack.c.0.s8 %v492
    %v494 = vlaneseq
    %v495 = vshrl.u32 %v494, 7
    %v496 = vsub.s32 %v493, %v495
    %v497 = vrot.slane %v483, %v496
    %v498 = vlaneseq
    %v499 = vshrl.u32 %v498, 7
    %v500 = vsub.s32 0, %v499
    %v501 = vrot.slane %v490, %v500
    %v502 = vlaneseq
    %v503 = vshrl.u32 %v502, 7
    %v504 = vsub.s32 0, %v503
    %v505 = vrot.slane %v497, %v504
    %506 = vrot.lane.b32.xlu0 %v501, 32
    %v507 = vpop.permute.xlu0 %506
    %508 = vrot.lane.b32.xlu0 %v505, 32
    %v509 = vpop.permute.xlu0 %508
    %512 = vst.msk [vmem:[#allocation7 + $0x6] sm:$0x1] %vm163, %v507
    %513 = vst.msk [vmem:[#allocation7 + $0x16] sm:$0x1] %vm163, %v509
    %514 = vrot.lane.b32.xlu0 %v122, 112
    %v515 = vpop.permute.xlu0 %514
    %v517 = vadd.f32 %v113, %v515
    %v518 = vmul.f32 %v517, %v517
    %520 = vrot.lane.b32.xlu0 %v518, 16
    %v521 = vpop.permute.xlu0 %520
    %v523 = vsel %vm126, %v521, 0.0
    %524 = vadd.xlane.f32.xlu0 %v523
    %v525 = vpop.xlane.xlu0 %524
    %v526 = vmul.f32 %v525, %v130
    %v527 = vadd.f32 %v526, 1e-08
    %v528 = vrsqrt.pop %v527
    %v529 = vmul.f32 %v517, %v528
    %vm530 = vcmp.ge.f32.partialorder %v529, 0.0
    %v531 = vmul.f32 %v529, 0.2
    %v532 = vsel %vm530, %v529, %v531
    %v535 = vunpack.c.l.s4 1966171168
    %v536 = vunpack.c.0.s8 %v535
    %v537 = vlaneseq
    %v538 = vshrl.u32 %v537, 7
    %v539 = vsub.s32 %v536, %v538
    %v540 = vrot.slane %v532, %v539
    %v541 = vcombine.high %v540, %v540
    %v543 = vunpack.c.l.s4 1966171168
    %v544 = vunpack.c.0.s8 %v543
    %v545 = vlaneseq
    %v546 = vshrl.u32 %v545, 7
    %v547 = vsub.s32 %v544, %v546
    %v548 = vrot.slane %v540, %v547
    %v550 = vunpack.c.l.s4 1966171168
    %v551 = vunpack.c.0.s8 %v550
    %v552 = vlaneseq
    %v553 = vshrl.u32 %v552, 7
    %v554 = vsub.s32 %v551, %v553
    %v555 = vrot.slane %v541, %v554
    %v556 = vlaneseq
    %v557 = vshrl.u32 %v556, 7
    %v558 = vsub.s32 0, %v557
    %v559 = vrot.slane %v548, %v558
    %v560 = vlaneseq
    %v561 = vshrl.u32 %v560, 7
    %v562 = vsub.s32 0, %v561
    %v563 = vrot.slane %v555, %v562
    %564 = vrot.lane.b32.xlu0 %v559, 16
    %v565 = vpop.permute.xlu0 %564
    %566 = vrot.lane.b32.xlu0 %v563, 16
    %v567 = vpop.permute.xlu0 %566
    %570 = vst.msk [vmem:[#allocation7 + $0x7] sm:$0x1] %vm163, %v565
    %571 = vst.msk [vmem:[#allocation7 + $0x17] sm:$0x1] %vm163, %v567
    %v572 = vadd.f32 %v115, %v122
    %v573 = vmul.f32 %v572, %v572
    %v574 = vsel %vm126, %v573, 0.0
    %575 = vadd.xlane.f32.xlu0 %v574
    %v576 = vpop.xlane.xlu0 %575
    %v577 = vmul.f32 %v576, %v130
    %v578 = vadd.f32 %v577, 1e-08
    %v579 = vrsqrt.pop %v578
    %v580 = vmul.f32 %v572, %v579
    %vm581 = vcmp.ge.f32.partialorder %v580, 0.0
    %v582 = vmul.f32 %v580, 0.2
    %v583 = vsel %vm581, %v580, %v582
    %v586 = vunpack.c.l.s4 1966171168
    %v587 = vunpack.c.0.s8 %v586
    %v588 = vlaneseq
    %v589 = vshrl.u32 %v588, 7
    %v590 = vsub.s32 %v587, %v589
    %v591 = vrot.slane %v583, %v590
    %v592 = vcombine.high %v591, %v591
    %v594 = vunpack.c.l.s4 1966171168
    %v595 = vunpack.c.0.s8 %v594
    %v596 = vlaneseq
    %v597 = vshrl.u32 %v596, 7
    %v598 = vsub.s32 %v595, %v597
    %v599 = vrot.slane %v591, %v598
    %v601 = vunpack.c.l.s4 1966171168
    %v602 = vunpack.c.0.s8 %v601
    %v603 = vlaneseq
    %v604 = vshrl.u32 %v603, 7
    %v605 = vsub.s32 %v602, %v604
    %v606 = vrot.slane %v592, %v605
    %609 = vst.msk [vmem:[#allocation7 + $0x8] sm:$0x1] %vm163, %v599
    %610 = vst.msk [vmem:[#allocation7 + $0x18] sm:$0x1] %vm163, %v606
    %v611 = vadd.f32 %v115, %v167
    %v612 = vmul.f32 %v611, %v611
    %614 = vrot.lane.b32.xlu0 %v612, 112
    %v615 = vpop.permute.xlu0 %614
    %v617 = vsel %vm126, %v615, 0.0
    %618 = vadd.xlane.f32.xlu0 %v617
    %v619 = vpop.xlane.xlu0 %618
    %v620 = vmul.f32 %v619, %v130
    %v621 = vadd.f32 %v620, 1e-08
    %v622 = vrsqrt.pop %v621
    %v623 = vmul.f32 %v611, %v622
    %vm624 = vcmp.ge.f32.partialorder %v623, 0.0
    %v625 = vmul.f32 %v623, 0.2
    %v626 = vsel %vm624, %v623, %v625
    %v629 = vunpack.c.l.s4 1966171168
    %v630 = vunpack.c.0.s8 %v629
    %v631 = vlaneseq
    %v632 = vshrl.u32 %v631, 7
    %v633 = vsub.s32 %v630, %v632
    %v634 = vrot.slane %v626, %v633
    %v635 = vcombine.high %v634, %v634
    %v637 = vunpack.c.l.s4 1966171168
    %v638 = vunpack.c.0.s8 %v637
    %v639 = vlaneseq
    %v640 = vshrl.u32 %v639, 7
    %v641 = vsub.s32 %v638, %v640
    %v642 = vrot.slane %v634, %v641
    %v644 = vunpack.c.l.s4 1966171168
    %v645 = vunpack.c.0.s8 %v644
    %v646 = vlaneseq
    %v647 = vshrl.u32 %v646, 7
    %v648 = vsub.s32 %v645, %v647
    %v649 = vrot.slane %v635, %v648
    %v650 = vlaneseq
    %v651 = vshrl.u32 %v650, 7
    %v652 = vsub.s32 0, %v651
    %v653 = vrot.slane %v642, %v652
    %v654 = vlaneseq
    %v655 = vshrl.u32 %v654, 7
    %v656 = vsub.s32 0, %v655
    %v657 = vrot.slane %v649, %v656
    %658 = vrot.lane.b32.xlu0 %v653, 112
    %v659 = vpop.permute.xlu0 %658
    %660 = vrot.lane.b32.xlu0 %v657, 112
    %v661 = vpop.permute.xlu0 %660
    %664 = vst.msk [vmem:[#allocation7 + $0x9] sm:$0x1] %vm163, %v659
    %665 = vst.msk [vmem:[#allocation7 + $0x19] sm:$0x1] %vm163, %v661
    %v666 = vadd.f32 %v115, %v225
    %v667 = vmul.f32 %v666, %v666
    %669 = vrot.lane.b32.xlu0 %v667, 96
    %v670 = vpop.permute.xlu0 %669
    %v672 = vsel %vm126, %v670, 0.0
    %673 = vadd.xlane.f32.xlu0 %v672
    %v674 = vpop.xlane.xlu0 %673
    %v675 = vmul.f32 %v674, %v130
    %v676 = vadd.f32 %v675, 1e-08
    %v677 = vrsqrt.pop %v676
    %v678 = vmul.f32 %v666, %v677
    %vm679 = vcmp.ge.f32.partialorder %v678, 0.0
    %v680 = vmul.f32 %v678, 0.2
    %v681 = vsel %vm679, %v678, %v680
    %v684 = vunpack.c.l.s4 1966171168
    %v685 = vunpack.c.0.s8 %v684
    %v686 = vlaneseq
    %v687 = vshrl.u32 %v686, 7
    %v688 = vsub.s32 %v685, %v687
    %v689 = vrot.slane %v681, %v688
    %v690 = vcombine.high %v689, %v689
    %v692 = vunpack.c.l.s4 1966171168
    %v693 = vunpack.c.0.s8 %v692
    %v694 = vlaneseq
    %v695 = vshrl.u32 %v694, 7
    %v696 = vsub.s32 %v693, %v695
    %v697 = vrot.slane %v689, %v696
    %v699 = vunpack.c.l.s4 1966171168
    %v700 = vunpack.c.0.s8 %v699
    %v701 = vlaneseq
    %v702 = vshrl.u32 %v701, 7
    %v703 = vsub.s32 %v700, %v702
    %v704 = vrot.slane %v690, %v703
    %v705 = vlaneseq
    %v706 = vshrl.u32 %v705, 7
    %v707 = vsub.s32 0, %v706
    %v708 = vrot.slane %v697, %v707
    %v709 = vlaneseq
    %v710 = vshrl.u32 %v709, 7
    %v711 = vsub.s32 0, %v710
    %v712 = vrot.slane %v704, %v711
    %713 = vrot.lane.b32.xlu0 %v708, 96
    %v714 = vpop.permute.xlu0 %713
    %715 = vrot.lane.b32.xlu0 %v712, 96
    %v716 = vpop.permute.xlu0 %715
    %719 = vst.msk [vmem:[#allocation7 + $0xa] sm:$0x1] %vm163, %v714
    %720 = vst.msk [vmem:[#allocation7 + $0x1a] sm:$0x1] %vm163, %v716
    %v721 = vadd.f32 %v115, %v283
    %v722 = vmul.f32 %v721, %v721
    %724 = vrot.lane.b32.xlu0 %v722, 80
    %v725 = vpop.permute.xlu0 %724
    %v727 = vsel %vm126, %v725, 0.0
    %728 = vadd.xlane.f32.xlu0 %v727
    %v729 = vpop.xlane.xlu0 %728
    %v730 = vmul.f32 %v729, %v130
    %v731 = vadd.f32 %v730, 1e-08
    %v732 = vrsqrt.pop %v731
    %v733 = vmul.f32 %v721, %v732
    %vm734 = vcmp.ge.f32.partialorder %v733, 0.0
    %v735 = vmul.f32 %v733, 0.2
    %v736 = vsel %vm734, %v733, %v735
    %v739 = vunpack.c.l.s4 1966171168
    %v740 = vunpack.c.0.s8 %v739
    %v741 = vlaneseq
    %v742 = vshrl.u32 %v741, 7
    %v743 = vsub.s32 %v740, %v742
    %v744 = vrot.slane %v736, %v743
    %v745 = vcombine.high %v744, %v744
    %v747 = vunpack.c.l.s4 1966171168
    %v748 = vunpack.c.0.s8 %v747
    %v749 = vlaneseq
    %v750 = vshrl.u32 %v749, 7
    %v751 = vsub.s32 %v748, %v750
    %v752 = vrot.slane %v744, %v751
    %v754 = vunpack.c.l.s4 1966171168
    %v755 = vunpack.c.0.s8 %v754
    %v756 = vlaneseq
    %v757 = vshrl.u32 %v756, 7
    %v758 = vsub.s32 %v755, %v757
    %v759 = vrot.slane %v745, %v758
    %v760 = vlaneseq
    %v761 = vshrl.u32 %v760, 7
    %v762 = vsub.s32 0, %v761
    %v763 = vrot.slane %v752, %v762
    %v764 = vlaneseq
    %v765 = vshrl.u32 %v764, 7
    %v766 = vsub.s32 0, %v765
    %v767 = vrot.slane %v759, %v766
    %768 = vrot.lane.b32.xlu0 %v763, 80
    %v769 = vpop.permute.xlu0 %768
    %770 = vrot.lane.b32.xlu0 %v767, 80
    %v771 = vpop.permute.xlu0 %770
    %774 = vst.msk [vmem:[#allocation7 + $0xb] sm:$0x1] %vm163, %v769
    %775 = vst.msk [vmem:[#allocation7 + $0x1b] sm:$0x1] %vm163, %v771
    %v776 = vadd.f32 %v115, %v341
    %v777 = vmul.f32 %v776, %v776
    %779 = vrot.lane.b32.xlu0 %v777, 64
    %v780 = vpop.permute.xlu0 %779
    %v782 = vsel %vm126, %v780, 0.0
    %783 = vadd.xlane.f32.xlu0 %v782
    %v784 = vpop.xlane.xlu0 %783
    %v785 = vmul.f32 %v784, %v130
    %v786 = vadd.f32 %v785, 1e-08
    %v787 = vrsqrt.pop %v786
    %v788 = vmul.f32 %v776, %v787
    %vm789 = vcmp.ge.f32.partialorder %v788, 0.0
    %v790 = vmul.f32 %v788, 0.2
    %v791 = vsel %vm789, %v788, %v790
    %v794 = vunpack.c.l.s4 1966171168
    %v795 = vunpack.c.0.s8 %v794
    %v796 = vlaneseq
    %v797 = vshrl.u32 %v796, 7
    %v798 = vsub.s32 %v795, %v797
    %v799 = vrot.slane %v791, %v798
    %v800 = vcombine.high %v799, %v799
    %v802 = vunpack.c.l.s4 1966171168
    %v803 = vunpack.c.0.s8 %v802
    %v804 = vlaneseq
    %v805 = vshrl.u32 %v804, 7
    %v806 = vsub.s32 %v803, %v805
    %v807 = vrot.slane %v799, %v806
    %v809 = vunpack.c.l.s4 1966171168
    %v810 = vunpack.c.0.s8 %v809
    %v811 = vlaneseq
    %v812 = vshrl.u32 %v811, 7
    %v813 = vsub.s32 %v810, %v812
    %v814 = vrot.slane %v800, %v813
    %v815 = vlaneseq
    %v816 = vshrl.u32 %v815, 7
    %v817 = vsub.s32 0, %v816
    %v818 = vrot.slane %v807, %v817
    %v819 = vlaneseq
    %v820 = vshrl.u32 %v819, 7
    %v821 = vsub.s32 0, %v820
    %v822 = vrot.slane %v814, %v821
    %823 = vrot.lane.b32.xlu0 %v818, 64
    %v824 = vpop.permute.xlu0 %823
    %825 = vrot.lane.b32.xlu0 %v822, 64
    %v826 = vpop.permute.xlu0 %825
    %829 = vst.msk [vmem:[#allocation7 + $0xc] sm:$0x1] %vm163, %v824
    %830 = vst.msk [vmem:[#allocation7 + $0x1c] sm:$0x1] %vm163, %v826
    %v831 = vadd.f32 %v115, %v399
    %v832 = vmul.f32 %v831, %v831
    %834 = vrot.lane.b32.xlu0 %v832, 48
    %v835 = vpop.permute.xlu0 %834
    %v837 = vsel %vm126, %v835, 0.0
    %838 = vadd.xlane.f32.xlu0 %v837
    %v839 = vpop.xlane.xlu0 %838
    %v840 = vmul.f32 %v839, %v130
    %v841 = vadd.f32 %v840, 1e-08
    %v842 = vrsqrt.pop %v841
    %v843 = vmul.f32 %v831, %v842
    %vm844 = vcmp.ge.f32.partialorder %v843, 0.0
    %v845 = vmul.f32 %v843, 0.2
    %v846 = vsel %vm844, %v843, %v845
    %v849 = vunpack.c.l.s4 1966171168
    %v850 = vunpack.c.0.s8 %v849
    %v851 = vlaneseq
    %v852 = vshrl.u32 %v851, 7
    %v853 = vsub.s32 %v850, %v852
    %v854 = vrot.slane %v846, %v853
    %v855 = vcombine.high %v854, %v854
    %v857 = vunpack.c.l.s4 1966171168
    %v858 = vunpack.c.0.s8 %v857
    %v859 = vlaneseq
    %v860 = vshrl.u32 %v859, 7
    %v861 = vsub.s32 %v858, %v860
    %v862 = vrot.slane %v854, %v861
    %v864 = vunpack.c.l.s4 1966171168
    %v865 = vunpack.c.0.s8 %v864
    %v866 = vlaneseq
    %v867 = vshrl.u32 %v866, 7
    %v868 = vsub.s32 %v865, %v867
    %v869 = vrot.slane %v855, %v868
    %v870 = vlaneseq
    %v871 = vshrl.u32 %v870, 7
    %v872 = vsub.s32 0, %v871
    %v873 = vrot.slane %v862, %v872
    %v874 = vlaneseq
    %v875 = vshrl.u32 %v874, 7
    %v876 = vsub.s32 0, %v875
    %v877 = vrot.slane %v869, %v876
    %878 = vrot.lane.b32.xlu0 %v873, 48
    %v879 = vpop.permute.xlu0 %878
    %880 = vrot.lane.b32.xlu0 %v877, 48
    %v881 = vpop.permute.xlu0 %880
    %884 = vst.msk [vmem:[#allocation7 + $0xd] sm:$0x1] %vm163, %v879
    %885 = vst.msk [vmem:[#allocation7 + $0x1d] sm:$0x1] %vm163, %v881
    %v886 = vadd.f32 %v115, %v457
    %v887 = vmul.f32 %v886, %v886
    %889 = vrot.lane.b32.xlu0 %v887, 32
    %v890 = vpop.permute.xlu0 %889
    %v892 = vsel %vm126, %v890, 0.0
    %893 = vadd.xlane.f32.xlu0 %v892
    %v894 = vpop.xlane.xlu0 %893
    %v895 = vmul.f32 %v894, %v130
    %v896 = vadd.f32 %v895, 1e-08
    %v897 = vrsqrt.pop %v896
    %v898 = vmul.f32 %v886, %v897
    %vm899 = vcmp.ge.f32.partialorder %v898, 0.0
    %v900 = vmul.f32 %v898, 0.2
    %v901 = vsel %vm899, %v898, %v900
    %v904 = vunpack.c.l.s4 1966171168
    %v905 = vunpack.c.0.s8 %v904
    %v906 = vlaneseq
    %v907 = vshrl.u32 %v906, 7
    %v908 = vsub.s32 %v905, %v907
    %v909 = vrot.slane %v901, %v908
    %v910 = vcombine.high %v909, %v909
    %v912 = vunpack.c.l.s4 1966171168
    %v913 = vunpack.c.0.s8 %v912
    %v914 = vlaneseq
    %v915 = vshrl.u32 %v914, 7
    %v916 = vsub.s32 %v913, %v915
    %v917 = vrot.slane %v909, %v916
    %v919 = vunpack.c.l.s4 1966171168
    %v920 = vunpack.c.0.s8 %v919
    %v921 = vlaneseq
    %v922 = vshrl.u32 %v921, 7
    %v923 = vsub.s32 %v920, %v922
    %v924 = vrot.slane %v910, %v923
    %v925 = vlaneseq
    %v926 = vshrl.u32 %v925, 7
    %v927 = vsub.s32 0, %v926
    %v928 = vrot.slane %v917, %v927
    %v929 = vlaneseq
    %v930 = vshrl.u32 %v929, 7
    %v931 = vsub.s32 0, %v930
    %v932 = vrot.slane %v924, %v931
    %933 = vrot.lane.b32.xlu0 %v928, 32
    %v934 = vpop.permute.xlu0 %933
    %935 = vrot.lane.b32.xlu0 %v932, 32
    %v936 = vpop.permute.xlu0 %935
    %939 = vst.msk [vmem:[#allocation7 + $0xe] sm:$0x1] %vm163, %v934
    %940 = vst.msk [vmem:[#allocation7 + $0x1e] sm:$0x1] %vm163, %v936
    %v941 = vadd.f32 %v115, %v515
    %v942 = vmul.f32 %v941, %v941
    %944 = vrot.lane.b32.xlu0 %v942, 16
    %v945 = vpop.permute.xlu0 %944
    %v947 = vsel %vm126, %v945, 0.0
    %948 = vadd.xlane.f32.xlu0 %v947
    %v949 = vpop.xlane.xlu0 %948
    %v950 = vmul.f32 %v949, %v130
    %v951 = vadd.f32 %v950, 1e-08
    %v952 = vrsqrt.pop %v951
    %v953 = vmul.f32 %v941, %v952
    %vm954 = vcmp.ge.f32.partialorder %v953, 0.0
    %v955 = vmul.f32 %v953, 0.2
    %v956 = vsel %vm954, %v953, %v955
    %v959 = vunpack.c.l.s4 1966171168
    %v960 = vunpack.c.0.s8 %v959
    %v961 = vlaneseq
    %v962 = vshrl.u32 %v961, 7
    %v963 = vsub.s32 %v960, %v962
    %v964 = vrot.slane %v956, %v963
    %v965 = vcombine.high %v964, %v964
    %v967 = vunpack.c.l.s4 1966171168
    %v968 = vunpack.c.0.s8 %v967
    %v969 = vlaneseq
    %v970 = vshrl.u32 %v969, 7
    %v971 = vsub.s32 %v968, %v970
    %v972 = vrot.slane %v964, %v971
    %v974 = vunpack.c.l.s4 1966171168
    %v975 = vunpack.c.0.s8 %v974
    %v976 = vlaneseq
    %v977 = vshrl.u32 %v976, 7
    %v978 = vsub.s32 %v975, %v977
    %v979 = vrot.slane %v965, %v978
    %v980 = vlaneseq
    %v981 = vshrl.u32 %v980, 7
    %v982 = vsub.s32 0, %v981
    %v983 = vrot.slane %v972, %v982
    %v984 = vlaneseq
    %v985 = vshrl.u32 %v984, 7
    %v986 = vsub.s32 0, %v985
    %v987 = vrot.slane %v979, %v986
    %988 = vrot.lane.b32.xlu0 %v983, 16
    %v989 = vpop.permute.xlu0 %988
    %990 = vrot.lane.b32.xlu0 %v987, 16
    %v991 = vpop.permute.xlu0 %990
    %994 = vst.msk [vmem:[#allocation7 + $0xf] sm:$0x1] %vm163, %v989
    %995 = vst.msk [vmem:[#allocation7 + $0x1f] sm:$0x1] %vm163, %v991
    // Predicated region
    $region22: #{tpu_custom_call.1} parent=1 // pred_check
      _
    $region23: #{tpu_custom_call.1} parent=1 // pred_check_branch
      %997 = sbr.rel (0) target = $region25
    $region24: #{tpu_custom_call.1} parent=1 // pred_region
      %s999 = ssub.s32 512, 512
      %1000 = vsyncadd [#allocation4], %s999
      %s1001 = sshll.u32 [#allocation7], 4
      %s1002 = int_to_ptr.vmem [resolvable:$true] %s1001
      %1007 = dma.vmem_to_hbm [thread:$0]  %s1002, 512, %s3, [#allocation4], 128, 128, 8
    $region25: #{tpu_custom_call.1} parent=1 // pred_fallthru
      _
    // Predicated region
    $region26: #{tpu_custom_call.1} parent=1 // pred_check
      _
    $region27: #{tpu_custom_call.1} parent=1 // pred_check_branch
      %1009 = sbr.rel (0) target = $region29
    $region28: #{tpu_custom_call.1} parent=1 // pred_region
      %1010 = dma.done [#allocation4], 512
    $region29: #{tpu_custom_call.1} parent=1 // pred_fallthru
      _
    %1011 = vsyncpa [#allocation3], 1
    %1012 = vsyncpa [#allocation6], 1
    %1013 = vsyncpa [#allocation4], 1

</llo_original>
